<compile_context>
chip_gen: v7x
topology: tpu7x:2x2x1
jax: 0.10.0
libtpu: 0.0.40
codegen_flags: <defaults>
</compile_context>

<pallas_src>
import jax
import jax.numpy as jnp
from jax.experimental import pallas as pl
from jax.experimental.pallas import tpu as pltpu

LANE = 128


def _round_up(n, m):
    return ((n + m - 1) // m) * m


# ---------------------------------------------------------------------------
# Kernel
# ---------------------------------------------------------------------------
def autoencoder_kernel(x_ref,
                       w1_ref, b1_ref, w2_ref, b2_ref, w3_ref, b3_ref,
                       w4_ref, b4_ref, w5_ref, b5_ref, w6_ref, b6_ref,
                       enc_ref, dec_ref):
    """Full encoder+decoder forward for one batch tile.

    Weights: bf16 [in, out] (transpose of nn.Linear weight), lane-padded so the
    64-wide hidden layers and the latent are 128-wide.  Biases: f32 [1, out],
    padded with zeros to match.  Padding is exact: pad weight rows/cols and pad
    bias entries are zero, and ReLU(0) = 0, so padded activation columns stay 0.
    """
    x = x_ref[...].astype(jnp.bfloat16)              # in-kernel f32 -> bf16 cast

    # Hoist bias loads: read each once per tile.
    b1 = b1_ref[...]
    b2 = b2_ref[...]
    b3 = b3_ref[...]
    b4 = b4_ref[...]
    b5 = b5_ref[...]
    b6 = b6_ref[...]

    # ---- encoder ----
    h = jnp.dot(x, w1_ref[...], preferred_element_type=jnp.float32) + b1
    h = jnp.maximum(h, 0.0).astype(jnp.bfloat16)
    h = jnp.dot(h, w2_ref[...], preferred_element_type=jnp.float32) + b2
    h = jnp.maximum(h, 0.0).astype(jnp.bfloat16)     # (tile_b, 128) lane-dense
    z = jnp.dot(h, w3_ref[...], preferred_element_type=jnp.float32) + b3
    enc_ref[...] = z.astype(enc_ref.dtype)           # lane-dense (tile_b, 128k)

    # ---- decoder ----
    d = jnp.dot(z.astype(jnp.bfloat16), w4_ref[...],
                preferred_element_type=jnp.float32) + b4
    d = jnp.maximum(d, 0.0).astype(jnp.bfloat16)     # (tile_b, 128) lane-dense
    d = jnp.dot(d, w5_ref[...], preferred_element_type=jnp.float32) + b5
    d = jnp.maximum(d, 0.0).astype(jnp.bfloat16)
    dec = jnp.dot(d, w6_ref[...], preferred_element_type=jnp.float32) + b6
    dec_ref[...] = dec.astype(dec_ref.dtype)


# ---------------------------------------------------------------------------
# Parameter preparation (run ONCE, outside the per-step forward)
# ---------------------------------------------------------------------------
def prepare_params(params, *, lane=LANE):
    """Cast weights to bf16, biases to f32, and zero-pad the 64-wide hidden
    layers and the latent dim up to 128 lanes.  Returns a flat tuple of 12
    arrays consumed by `autoencoder_forward`."""
    h1 = params["w1"].shape[1]                       # 256
    h2 = params["w2"].shape[1]                       # 64
    latent_dim = params["w3"].shape[1]
    h2p = _round_up(max(h2, lane), lane)             # 128
    latp = _round_up(max(latent_dim, lane), lane)    # 128

    def padw(w, rows, cols):
        return jnp.pad(w, ((0, rows - w.shape[0]), (0, cols - w.shape[1])))

    def padb(b, cols):
        return jnp.pad(b, ((0, 0), (0, cols - b.shape[1])))

    return (
        params["w1"].astype(jnp.bfloat16),
        params["b1"].astype(jnp.float32),
        padw(params["w2"], h1, h2p).astype(jnp.bfloat16),
        padb(params["b2"], h2p).astype(jnp.float32),
        padw(params["w3"], h2p, latp).astype(jnp.bfloat16),
        padb(params["b3"], latp).astype(jnp.float32),
        padw(params["w4"], latp, h2p).astype(jnp.bfloat16),
        padb(params["b4"], h2p).astype(jnp.float32),
        padw(params["w5"], h2p, h1).astype(jnp.bfloat16),
        params["b5"].astype(jnp.float32),
        params["w6"].astype(jnp.bfloat16),
        params["b6"].astype(jnp.float32),
    )


def _default_tile_b(B):
    """Fewest, largest grid steps: 1 step on 1-TC chips (v5e/v6e), 2 equal
    steps on v7x (2 TCs/chip).  Always a multiple of 16 (bf16 packing), cap 512."""
    bp16 = _round_up(B, 16)
    try:
        kind = jax.devices()[0].device_kind.lower()
    except Exception:
        kind = ""
    two_tc = "v7" in kind
    if two_tc and bp16 >= 32:
        return min(512, _round_up(pl.cdiv(bp16, 2), 16))
    return min(512, bp16)


# ---------------------------------------------------------------------------
# Wrapper
# ---------------------------------------------------------------------------
def autoencoder_forward(x, prepared, latent_dim, *, tile_b=None):
    """x: [B, input_dim] f32.  prepared: output of prepare_params.
    Returns (encoded [B, latent_dim] f32, decoded [B, input_dim] f32)."""
    B, input_dim = x.shape
    (w1, b1, w2, b2, w3, b3, w4, b4, w5, b5, w6, b6) = prepared
    h1 = w1.shape[1]
    h2p = w2.shape[1]
    lat_pad = w3.shape[1]

    if tile_b is None:
        tile_b = _default_tile_b(B)
    tile_b = max(16, _round_up(tile_b, 16))

    Bp = _round_up(B, tile_b)
    xp = x if Bp == B else jnp.pad(x, ((0, Bp - B), (0, 0)))

    def full_spec(arr):
        # Constant index map -> block DMA'd once and kept resident across steps.
        return pl.BlockSpec(arr.shape, lambda i: (0,) * arr.ndim)

    in_specs = [pl.BlockSpec((tile_b, input_dim), lambda i: (i, 0))]
    in_specs += [full_spec(a) for a in prepared]

    out_shape = (
        jax.ShapeDtypeStruct((Bp, lat_pad), jnp.float32),
        jax.ShapeDtypeStruct((Bp, input_dim), jnp.float32),
    )
    out_specs = (
        pl.BlockSpec((tile_b, lat_pad), lambda i: (i, 0)),
        pl.BlockSpec((tile_b, input_dim), lambda i: (i, 0)),
    )

    flops = 2 * Bp * (input_dim * h1 + h1 * h2p + h2p * lat_pad
                      + lat_pad * h2p + h2p * h1 + h1 * input_dim)
    bytes_accessed = (xp.size * xp.dtype.itemsize
                      + sum(a.size * a.dtype.itemsize for a in prepared)
                      + Bp * lat_pad * 4 + Bp * input_dim * 4)
    cost = pl.CostEstimate(flops=flops, transcendentals=0,
                           bytes_accessed=bytes_accessed)

    fn = pl.pallas_call(
        autoencoder_kernel,
        out_shape=out_shape,
        grid=(Bp // tile_b,),
        in_specs=in_specs,
        out_specs=out_specs,
        compiler_params=pltpu.CompilerParams(
            dimension_semantics=("parallel",)),
        cost_estimate=cost,
    )
    enc_p, dec_p = fn(xp, *prepared)
    # Slice off batch padding and the zero-padded latent lanes.
    return enc_p[:B, :latent_dim], dec_p[:B, :]


# ---------------------------------------------------------------------------
# Init + references
# ---------------------------------------------------------------------------
def init_params(key, input_dim, latent_dim):
    """Deterministic parameter init matching the nn.Linear shapes.
    Weights are [in, out]; biases are [1, out]. All f32."""
    dims = [(input_dim, 256), (256, 64), (64, latent_dim),
            (latent_dim, 64), (64, 256), (256, input_dim)]
    params = {}
    keys = jax.random.split(key, len(dims))
    for n, ((d_in, d_out), k) in enumerate(zip(dims, keys), start=1):
        kw, kb = jax.random.split(k)
        bound = 1.0 / jnp.sqrt(d_in)
        params[f"w{n}"] = jax.random.uniform(
            kw, (d_in, d_out), jnp.float32, minval=-bound, maxval=bound)
        params[f"b{n}"] = jax.random.uniform(
            kb, (1, d_out), jnp.float32, minval=-bound, maxval=bound)
    return params


def reference_forward_f32(x, params):
    """Pure-f32 JAX reference (semantics of the PyTorch module)."""
    h = jnp.maximum(x @ params["w1"] + params["b1"], 0.0)
    h = jnp.maximum(h @ params["w2"] + params["b2"], 0.0)
    z = h @ params["w3"] + params["b3"]
    d = jnp.maximum(z @ params["w4"] + params["b4"], 0.0)
    d = jnp.maximum(d @ params["w5"] + params["b5"], 0.0)
    dec = d @ params["w6"] + params["b6"]
    return z, dec


def reference_forward_bf16(x, params):
    """Precision-matched reference: bf16 matmul inputs, f32 accumulation."""
    def lin(h, w, b):
        return jnp.dot(h.astype(jnp.bfloat16), w.astype(jnp.bfloat16),
                       preferred_element_type=jnp.float32) + b
    h = jnp.maximum(lin(x, params["w1"], params["b1"]), 0.0)
    h = jnp.maximum(lin(h, params["w2"], params["b2"]), 0.0)
    z = lin(h, params["w3"], params["b3"])
    d = jnp.maximum(lin(z, params["w4"], params["b4"]), 0.0)
    d = jnp.maximum(lin(d, params["w5"], params["b5"]), 0.0)
    dec = lin(d, params["w6"], params["b6"])
    return z, dec


if __name__ == "__main__":
    key = jax.random.PRNGKey(0)
    k_param, k_x = jax.random.split(key)

    B, input_dim, latent_dim = 256, 128, 32
    params = init_params(k_param, input_dim, latent_dim)
    x = jax.random.normal(k_x, (B, input_dim), jnp.float32)

    # Prepare (cast + pad) the parameters once, outside the forward pass.
    prepared = prepare_params(params)

    fwd = jax.jit(lambda xx, pp: autoencoder_forward(xx, pp, latent_dim))
    encoded, decoded = fwd(x, prepared)
    encoded = jax.block_until_ready(encoded)
    decoded = jax.block_until_ready(decoded)

    assert encoded.shape == (B, latent_dim)
    assert decoded.shape == (B, input_dim)

    # Tight check against the precision-matched (bf16 matmul) reference.
    enc_ref, dec_ref = reference_forward_bf16(x, params)
    assert jnp.allclose(encoded, enc_ref, atol=1e-2, rtol=1e-2)
    assert jnp.allclose(decoded, dec_ref, atol=1e-2, rtol=1e-2)

    # Loose sanity check against the pure-f32 reference (bf16 rounding only).
    enc_f32, dec_f32 = reference_forward_f32(x, params)
    assert float(jnp.max(jnp.abs(encoded - enc_f32))) < 0.25
    assert float(jnp.max(jnp.abs(decoded - dec_f32))) < 0.25

    print("KERNEL_OK")
</pallas_src>

<mosaic_0001>
module attributes {stable_mosaic.version = 11 : i64} {
  func.func @autoencoder_kernel(%arg0: i32, %arg1: memref<256x128xf32, #tpu.memory_space<vmem>>, %arg2: memref<128x256xbf16, #tpu.memory_space<vmem>>, %arg3: memref<1x256xf32, #tpu.memory_space<vmem>>, %arg4: memref<256x128xbf16, #tpu.memory_space<vmem>>, %arg5: memref<1x128xf32, #tpu.memory_space<vmem>>, %arg6: memref<128x128xbf16, #tpu.memory_space<vmem>>, %arg7: memref<1x128xf32, #tpu.memory_space<vmem>>, %arg8: memref<128x128xbf16, #tpu.memory_space<vmem>>, %arg9: memref<1x128xf32, #tpu.memory_space<vmem>>, %arg10: memref<128x256xbf16, #tpu.memory_space<vmem>>, %arg11: memref<1x256xf32, #tpu.memory_space<vmem>>, %arg12: memref<256x128xbf16, #tpu.memory_space<vmem>>, %arg13: memref<1x128xf32, #tpu.memory_space<vmem>>, %arg14: memref<256x128xf32, #tpu.memory_space<vmem>>, %arg15: memref<256x128xf32, #tpu.memory_space<vmem>>) attributes {dimension_semantics = [#tpu.dimension_semantics<parallel>], iteration_bounds = array<i64: 1>, scalar_prefetch = 0 : i64, scratch_operands = 0 : i64, tpu.core_type = #tpu.core_type<tc>, window_params = [{transform_indices = @transform_0, window_bounds = array<i64: 256, 128>}, {pipeline_mode = #tpu.pipeline_mode<synchronous>, transform_indices = @transform_1, window_bounds = array<i64: 128, 256>}, {pipeline_mode = #tpu.pipeline_mode<synchronous>, transform_indices = @transform_2, window_bounds = array<i64: 1, 256>}, {pipeline_mode = #tpu.pipeline_mode<synchronous>, transform_indices = @transform_3, window_bounds = array<i64: 256, 128>}, {pipeline_mode = #tpu.pipeline_mode<synchronous>, transform_indices = @transform_4, window_bounds = array<i64: 1, 128>}, {pipeline_mode = #tpu.pipeline_mode<synchronous>, transform_indices = @transform_5, window_bounds = array<i64: 128, 128>}, {pipeline_mode = #tpu.pipeline_mode<synchronous>, transform_indices = @transform_6, window_bounds = array<i64: 1, 128>}, {pipeline_mode = #tpu.pipeline_mode<synchronous>, transform_indices = @transform_7, window_bounds = array<i64: 128, 128>}, {pipeline_mode = #tpu.pipeline_mode<synchronous>, transform_indices = @transform_8, window_bounds = array<i64: 1, 128>}, {pipeline_mode = #tpu.pipeline_mode<synchronous>, transform_indices = @transform_9, window_bounds = array<i64: 128, 256>}, {pipeline_mode = #tpu.pipeline_mode<synchronous>, transform_indices = @transform_10, window_bounds = array<i64: 1, 256>}, {pipeline_mode = #tpu.pipeline_mode<synchronous>, transform_indices = @transform_11, window_bounds = array<i64: 256, 128>}, {pipeline_mode = #tpu.pipeline_mode<synchronous>, transform_indices = @transform_12, window_bounds = array<i64: 1, 128>}, {transform_indices = @transform_13, window_bounds = array<i64: 256, 128>}, {transform_indices = @transform_14, window_bounds = array<i64: 256, 128>}]} {
    %c0 = arith.constant 0 : index
    %c0_0 = arith.constant 0 : index
    %0 = vector.load %arg1[%c0, %c0_0] : memref<256x128xf32, #tpu.memory_space<vmem>>, vector<256x128xf32>
    %1 = arith.truncf %0 : vector<256x128xf32> to vector<256x128xbf16>
    %c0_1 = arith.constant 0 : index
    %c0_2 = arith.constant 0 : index
    %2 = vector.load %arg3[%c0_1, %c0_2] : memref<1x256xf32, #tpu.memory_space<vmem>>, vector<1x256xf32>
    %c0_3 = arith.constant 0 : index
    %c0_4 = arith.constant 0 : index
    %3 = vector.load %arg5[%c0_3, %c0_4] : memref<1x128xf32, #tpu.memory_space<vmem>>, vector<1x128xf32>
    %c0_5 = arith.constant 0 : index
    %c0_6 = arith.constant 0 : index
    %4 = vector.load %arg7[%c0_5, %c0_6] : memref<1x128xf32, #tpu.memory_space<vmem>>, vector<1x128xf32>
    %c0_7 = arith.constant 0 : index
    %c0_8 = arith.constant 0 : index
    %5 = vector.load %arg9[%c0_7, %c0_8] : memref<1x128xf32, #tpu.memory_space<vmem>>, vector<1x128xf32>
    %c0_9 = arith.constant 0 : index
    %c0_10 = arith.constant 0 : index
    %6 = vector.load %arg11[%c0_9, %c0_10] : memref<1x256xf32, #tpu.memory_space<vmem>>, vector<1x256xf32>
    %c0_11 = arith.constant 0 : index
    %c0_12 = arith.constant 0 : index
    %7 = vector.load %arg13[%c0_11, %c0_12] : memref<1x128xf32, #tpu.memory_space<vmem>>, vector<1x128xf32>
    %c0_13 = arith.constant 0 : index
    %c0_14 = arith.constant 0 : index
    %8 = vector.load %arg2[%c0_13, %c0_14] : memref<128x256xbf16, #tpu.memory_space<vmem>>, vector<128x256xbf16>
    %cst = arith.constant dense<0.000000e+00> : vector<256x256xf32>
    %9 = tpu.matmul %1, %8, %cst {dimension_numbers = #tpu.dot_dimension_numbers<[1], [0], [0], [1], [0, 0, 1, 1], [], []>} : vector<256x128xbf16>, vector<128x256xbf16>, vector<256x256xf32> -> vector<256x256xf32>
    %10 = vector.broadcast %2 : vector<1x256xf32> to vector<256x256xf32>
    %11 = arith.addf %9, %10 : vector<256x256xf32>
    %cst_15 = arith.constant 0.000000e+00 : f32
    %12 = vector.broadcast %cst_15 : f32 to vector<256x256xf32>
    %13 = arith.maximumf %11, %12 : vector<256x256xf32>
    %14 = arith.truncf %13 : vector<256x256xf32> to vector<256x256xbf16>
    %c0_16 = arith.constant 0 : index
    %c0_17 = arith.constant 0 : index
    %15 = vector.load %arg4[%c0_16, %c0_17] : memref<256x128xbf16, #tpu.memory_space<vmem>>, vector<256x128xbf16>
    %cst_18 = arith.constant dense<0.000000e+00> : vector<256x128xf32>
    %16 = tpu.matmul %14, %15, %cst_18 {dimension_numbers = #tpu.dot_dimension_numbers<[1], [0], [0], [1], [0, 0, 1, 1], [], []>} : vector<256x256xbf16>, vector<256x128xbf16>, vector<256x128xf32> -> vector<256x128xf32>
    %17 = vector.broadcast %3 : vector<1x128xf32> to vector<256x128xf32>
    %18 = arith.addf %16, %17 : vector<256x128xf32>
    %cst_19 = arith.constant 0.000000e+00 : f32
    %19 = vector.broadcast %cst_19 : f32 to vector<256x128xf32>
    %20 = arith.maximumf %18, %19 : vector<256x128xf32>
    %21 = arith.truncf %20 : vector<256x128xf32> to vector<256x128xbf16>
    %c0_20 = arith.constant 0 : index
    %c0_21 = arith.constant 0 : index
    %22 = vector.load %arg6[%c0_20, %c0_21] : memref<128x128xbf16, #tpu.memory_space<vmem>>, vector<128x128xbf16>
    %cst_22 = arith.constant dense<0.000000e+00> : vector<256x128xf32>
    %23 = tpu.matmul %21, %22, %cst_22 {dimension_numbers = #tpu.dot_dimension_numbers<[1], [0], [0], [1], [0, 0, 1, 1], [], []>} : vector<256x128xbf16>, vector<128x128xbf16>, vector<256x128xf32> -> vector<256x128xf32>
    %24 = vector.broadcast %4 : vector<1x128xf32> to vector<256x128xf32>
    %25 = arith.addf %23, %24 : vector<256x128xf32>
    %c0_23 = arith.constant 0 : index
    %c0_24 = arith.constant 0 : index
    %26 = vector.load %arg14[%c0_23, %c0_24] : memref<256x128xf32, #tpu.memory_space<vmem>>, vector<256x128xf32>
    tpu.vector_store %arg14[%c0_23, %c0_24], %25 {strides = array<i32>} : memref<256x128xf32, #tpu.memory_space<vmem>>, vector<256x128xf32>,
    %27 = arith.truncf %25 : vector<256x128xf32> to vector<256x128xbf16>
    %c0_25 = arith.constant 0 : index
    %c0_26 = arith.constant 0 : index
    %28 = vector.load %arg8[%c0_25, %c0_26] : memref<128x128xbf16, #tpu.memory_space<vmem>>, vector<128x128xbf16>
    %cst_27 = arith.constant dense<0.000000e+00> : vector<256x128xf32>
    %29 = tpu.matmul %27, %28, %cst_27 {dimension_numbers = #tpu.dot_dimension_numbers<[1], [0], [0], [1], [0, 0, 1, 1], [], []>} : vector<256x128xbf16>, vector<128x128xbf16>, vector<256x128xf32> -> vector<256x128xf32>
    %30 = vector.broadcast %5 : vector<1x128xf32> to vector<256x128xf32>
    %31 = arith.addf %29, %30 : vector<256x128xf32>
    %cst_28 = arith.constant 0.000000e+00 : f32
    %32 = vector.broadcast %cst_28 : f32 to vector<256x128xf32>
    %33 = arith.maximumf %31, %32 : vector<256x128xf32>
    %34 = arith.truncf %33 : vector<256x128xf32> to vector<256x128xbf16>
    %c0_29 = arith.constant 0 : index
    %c0_30 = arith.constant 0 : index
    %35 = vector.load %arg10[%c0_29, %c0_30] : memref<128x256xbf16, #tpu.memory_space<vmem>>, vector<128x256xbf16>
    %cst_31 = arith.constant dense<0.000000e+00> : vector<256x256xf32>
    %36 = tpu.matmul %34, %35, %cst_31 {dimension_numbers = #tpu.dot_dimension_numbers<[1], [0], [0], [1], [0, 0, 1, 1], [], []>} : vector<256x128xbf16>, vector<128x256xbf16>, vector<256x256xf32> -> vector<256x256xf32>
    %37 = vector.broadcast %6 : vector<1x256xf32> to vector<256x256xf32>
    %38 = arith.addf %36, %37 : vector<256x256xf32>
    %cst_32 = arith.constant 0.000000e+00 : f32
    %39 = vector.broadcast %cst_32 : f32 to vector<256x256xf32>
    %40 = arith.maximumf %38, %39 : vector<256x256xf32>
    %41 = arith.truncf %40 : vector<256x256xf32> to vector<256x256xbf16>
    %c0_33 = arith.constant 0 : index
    %c0_34 = arith.constant 0 : index
    %42 = vector.load %arg12[%c0_33, %c0_34] : memref<256x128xbf16, #tpu.memory_space<vmem>>, vector<256x128xbf16>
    %cst_35 = arith.constant dense<0.000000e+00> : vector<256x128xf32>
    %43 = tpu.matmul %41, %42, %cst_35 {dimension_numbers = #tpu.dot_dimension_numbers<[1], [0], [0], [1], [0, 0, 1, 1], [], []>} : vector<256x256xbf16>, vector<256x128xbf16>, vector<256x128xf32> -> vector<256x128xf32>
    %44 = vector.broadcast %7 : vector<1x128xf32> to vector<256x128xf32>
    %45 = arith.addf %43, %44 : vector<256x128xf32>
    %c0_36 = arith.constant 0 : index
    %c0_37 = arith.constant 0 : index
    %46 = vector.load %arg15[%c0_36, %c0_37] : memref<256x128xf32, #tpu.memory_space<vmem>>, vector<256x128xf32>
    tpu.vector_store %arg15[%c0_36, %c0_37], %45 {strides = array<i32>} : memref<256x128xf32, #tpu.memory_space<vmem>>, vector<256x128xf32>,
    return
  }
  func.func @transform_0(%arg0: i32) -> (i32, i32) {
    %c0_i32 = arith.constant 0 : i32
    %c0_i32_0 = arith.constant 0 : i32
    return %arg0, %c0_i32 : i32, i32
  }
  func.func @transform_1(%arg0: i32) -> (i32, i32) {
    %c0_i32 = arith.constant 0 : i32
    %c0_i32_0 = arith.constant 0 : i32
    %c0_i32_1 = arith.constant 0 : i32
    return %c0_i32, %c0_i32_0 : i32, i32
  }
  func.func @transform_2(%arg0: i32) -> (i32, i32) {
    %c0_i32 = arith.constant 0 : i32
    %c0_i32_0 = arith.constant 0 : i32
    %c0_i32_1 = arith.constant 0 : i32
    return %c0_i32, %c0_i32_0 : i32, i32
  }
  func.func @transform_3(%arg0: i32) -> (i32, i32) {
    %c0_i32 = arith.constant 0 : i32
    %c0_i32_0 = arith.constant 0 : i32
    %c0_i32_1 = arith.constant 0 : i32
    return %c0_i32, %c0_i32_0 : i32, i32
  }
  func.func @transform_4(%arg0: i32) -> (i32, i32) {
    %c0_i32 = arith.constant 0 : i32
    %c0_i32_0 = arith.constant 0 : i32
    %c0_i32_1 = arith.constant 0 : i32
    return %c0_i32, %c0_i32_0 : i32, i32
  }
  func.func @transform_5(%arg0: i32) -> (i32, i32) {
    %c0_i32 = arith.constant 0 : i32
    %c0_i32_0 = arith.constant 0 : i32
    %c0_i32_1 = arith.constant 0 : i32
    return %c0_i32, %c0_i32_0 : i32, i32
  }
  func.func @transform_6(%arg0: i32) -> (i32, i32) {
    %c0_i32 = arith.constant 0 : i32
    %c0_i32_0 = arith.constant 0 : i32
    %c0_i32_1 = arith.constant 0 : i32
    return %c0_i32, %c0_i32_0 : i32, i32
  }
  func.func @transform_7(%arg0: i32) -> (i32, i32) {
    %c0_i32 = arith.constant 0 : i32
    %c0_i32_0 = arith.constant 0 : i32
    %c0_i32_1 = arith.constant 0 : i32
    return %c0_i32, %c0_i32_0 : i32, i32
  }
  func.func @transform_8(%arg0: i32) -> (i32, i32) {
    %c0_i32 = arith.constant 0 : i32
    %c0_i32_0 = arith.constant 0 : i32
    %c0_i32_1 = arith.constant 0 : i32
    return %c0_i32, %c0_i32_0 : i32, i32
  }
  func.func @transform_9(%arg0: i32) -> (i32, i32) {
    %c0_i32 = arith.constant 0 : i32
    %c0_i32_0 = arith.constant 0 : i32
    %c0_i32_1 = arith.constant 0 : i32
    return %c0_i32, %c0_i32_0 : i32, i32
  }
  func.func @transform_10(%arg0: i32) -> (i32, i32) {
    %c0_i32 = arith.constant 0 : i32
    %c0_i32_0 = arith.constant 0 : i32
    %c0_i32_1 = arith.constant 0 : i32
    return %c0_i32, %c0_i32_0 : i32, i32
  }
  func.func @transform_11(%arg0: i32) -> (i32, i32) {
    %c0_i32 = arith.constant 0 : i32
    %c0_i32_0 = arith.constant 0 : i32
    %c0_i32_1 = arith.constant 0 : i32
    return %c0_i32, %c0_i32_0 : i32, i32
  }
  func.func @transform_12(%arg0: i32) -> (i32, i32) {
    %c0_i32 = arith.constant 0 : i32
    %c0_i32_0 = arith.constant 0 : i32
    %c0_i32_1 = arith.constant 0 : i32
    return %c0_i32, %c0_i32_0 : i32, i32
  }
  func.func @transform_13(%arg0: i32) -> (i32, i32) {
    %c0_i32 = arith.constant 0 : i32
    %c0_i32_0 = arith.constant 0 : i32
    return %arg0, %c0_i32 : i32, i32
  }
  func.func @transform_14(%arg0: i32) -> (i32, i32) {
    %c0_i32 = arith.constant 0 : i32
    %c0_i32_0 = arith.constant 0 : i32
    return %arg0, %c0_i32 : i32, i32
  }
}

</mosaic_0001>

<llo_original>
// kernel: _lambda_.1
$region0: #{_lambda_.1}
  #allocation0 [shape = 'u32[]', space=smem, size = 0x4, offset = 0x4, fixed_abs, tag = 'smem constant byte address 0x4 - core index']
  #allocation1 [shape = 'u32[144,128]{1,0:T(1,128)}', space=vmem, size = 0x12000, scoped, tag = 'internal scratch']
  %s0 = inlined_call_operand.hbm [shape: f32[256,128], index: 0, kind: input, shape index: {}]
  %s1 = inlined_call_operand.hbm [shape: bf16[128,256], index: 1, kind: input, shape index: {}]
  %s2 = inlined_call_operand.vmem [shape: f32[1,256], index: 2, kind: input, shape index: {}]
  %s3 = inlined_call_operand.hbm [shape: bf16[256,128], index: 3, kind: input, shape index: {}]
  %s4 = inlined_call_operand.vmem [shape: f32[1,128], index: 4, kind: input, shape index: {}]
  %s5 = inlined_call_operand.hbm [shape: bf16[128,128], index: 5, kind: input, shape index: {}]
  %s6 = inlined_call_operand.vmem [shape: f32[1,128], index: 6, kind: input, shape index: {}]
  %s7 = inlined_call_operand.hbm [shape: bf16[128,128], index: 7, kind: input, shape index: {}]
  %s8 = inlined_call_operand.vmem [shape: f32[1,128], index: 8, kind: input, shape index: {}]
  %s9 = inlined_call_operand.hbm [shape: bf16[128,256], index: 9, kind: input, shape index: {}]
  %s10 = inlined_call_operand.vmem [shape: f32[1,256], index: 10, kind: input, shape index: {}]
  %s11 = inlined_call_operand.hbm [shape: bf16[256,128], index: 11, kind: input, shape index: {}]
  %s12 = inlined_call_operand.vmem [shape: f32[1,128], index: 12, kind: input, shape index: {}]
  %s13 = inlined_call_operand.vmem [shape: f32[256,128], index: 13, kind: output, shape index: {0}]
  %s14 = inlined_call_operand.hbm [shape: f32[256,128], index: 14, kind: output, shape index: {1}]
  %15 = xla_tuple %s13, %s14
  %s16 = sld [smem:[#allocation0]]
  $region98: #{_lambda_.1} parent=0
    _
  %s18 = ssub.s32 1, %s16
  %s19 = scalar_select 0, %s18, %s16
  $region1: #{_lambda_.1} parent=0
    #allocation2 [shape = 'u8[131072]{0}', space=vmem, size = 0x20000, scoped, tag = 'input window, operand 0, single buffered']
    #allocation3 [shape = 's32[1]{0}', space=sflag, size = 0x4, scoped, tag = 'scoped memory for _lambda_.1']
    #allocation4 [shape = 's32[1]{0}', space=sflag, size = 0x4, scoped, tag = 'scoped memory for _lambda_.1']
    #allocation5 [shape = 'u8[65536]{0}', space=vmem, size = 0x10000, scoped, tag = 'input window, operand 1, single buffered']
    #allocation6 [shape = 's32[1]{0}', space=sflag, size = 0x4, scoped, tag = 'scoped memory for _lambda_.1']
    #allocation7 [shape = 'u8[65536]{0}', space=vmem, size = 0x10000, scoped, tag = 'input window, operand 3, single buffered']
    #allocation8 [shape = 'u8[32768]{0}', space=vmem, size = 0x8000, scoped, tag = 'input window, operand 5, single buffered']
    #allocation9 [shape = 's32[1]{0}', space=sflag, size = 0x4, scoped, tag = 'scoped memory for _lambda_.1']
    #allocation10 [shape = 'u8[32768]{0}', space=vmem, size = 0x8000, scoped, tag = 'input window, operand 7, single buffered']
    #allocation11 [shape = 'u8[65536]{0}', space=vmem, size = 0x10000, scoped, tag = 'input window, operand 9, single buffered']
    #allocation12 [shape = 's32[1]{0}', space=sflag, size = 0x4, scoped, tag = 'scoped memory for _lambda_.1']
    #allocation13 [shape = 'u8[65536]{0}', space=vmem, size = 0x10000, scoped, tag = 'input window, operand 11, single buffered']
    #allocation14 [shape = 'u8[131072]{0}', space=vmem, size = 0x20000, scoped, tag = 'output window, operand 1, single buffered']
    %20 = vsyncpa [#allocation3], 0
    %21 = vsyncpa [#allocation6], 0
    %22 = vsyncpa [#allocation9], 0
    %23 = vsyncpa [#allocation12], 0
    %24 = vsyncpa [#allocation4], 0
    // Predicated region
    $region2: #{_lambda_.1} parent=1 // pred_check
      _
    $region3: #{_lambda_.1} parent=1 // pred_check_branch
      %26 = sbr.rel (0) target = $region5
    $region4: #{_lambda_.1} parent=1 // pred_region
      %s28 = ssub.s32 4096, 4096
      %29 = vsyncadd [#allocation3], %s28
      %s30 = sshll.u32 [#allocation2], 4
      %s31 = int_to_ptr.vmem [resolvable:$true] %s30
      %36 = dma.hbm_to_vmem [thread:$0]  %s0, 4096, %s31, [#allocation3], 128, 128, 8
    $region5: #{_lambda_.1} parent=1 // pred_fallthru
      _
    // Predicated region
    $region6: #{_lambda_.1} parent=1 // pred_check
      _
    $region7: #{_lambda_.1} parent=1 // pred_check_branch
      %38 = sbr.rel (0) target = $region9
    $region8: #{_lambda_.1} parent=1 // pred_region
      %s40 = ssub.s32 2048, 2048
      %41 = vsyncadd [#allocation6], %s40
      %s42 = sshll.u32 [#allocation5], 4
      %s43 = int_to_ptr.vmem [resolvable:$true] %s42
      %48 = dma.hbm_to_vmem [thread:$0]  %s1, 2048, %s43, [#allocation6], 128, 128, 8
    $region9: #{_lambda_.1} parent=1 // pred_fallthru
      _
    // Predicated region
    $region10: #{_lambda_.1} parent=1 // pred_check
      _
    $region11: #{_lambda_.1} parent=1 // pred_check_branch
      %50 = sbr.rel (0) target = $region13
    $region12: #{_lambda_.1} parent=1 // pred_region
      _
    $region13: #{_lambda_.1} parent=1 // pred_fallthru
      _
    // Predicated region
    $region14: #{_lambda_.1} parent=1 // pred_check
      _
    $region15: #{_lambda_.1} parent=1 // pred_check_branch
      %52 = sbr.rel (0) target = $region17
    $region16: #{_lambda_.1} parent=1 // pred_region
      %s54 = ssub.s32 2048, 2048
      %55 = vsyncadd [#allocation6], %s54
      %s56 = sshll.u32 [#allocation7], 4
      %s57 = int_to_ptr.vmem [resolvable:$true] %s56
      %62 = dma.hbm_to_vmem [thread:$0]  %s3, 2048, %s57, [#allocation6], 64, 64, 4
    $region17: #{_lambda_.1} parent=1 // pred_fallthru
      _
    // Predicated region
    $region18: #{_lambda_.1} parent=1 // pred_check
      _
    $region19: #{_lambda_.1} parent=1 // pred_check_branch
      %64 = sbr.rel (0) target = $region21
    $region20: #{_lambda_.1} parent=1 // pred_region
      _
    $region21: #{_lambda_.1} parent=1 // pred_fallthru
      _
    // Predicated region
    $region22: #{_lambda_.1} parent=1 // pred_check
      _
    $region23: #{_lambda_.1} parent=1 // pred_check_branch
      %66 = sbr.rel (0) target = $region25
    $region24: #{_lambda_.1} parent=1 // pred_region
      %s68 = ssub.s32 1024, 1024
      %69 = vsyncadd [#allocation9], %s68
      %s70 = sshll.u32 [#allocation8], 4
      %s71 = int_to_ptr.vmem [resolvable:$true] %s70
      %76 = dma.hbm_to_vmem [thread:$0]  %s5, 1024, %s71, [#allocation9], 64, 64, 4
    $region25: #{_lambda_.1} parent=1 // pred_fallthru
      _
    // Predicated region
    $region26: #{_lambda_.1} parent=1 // pred_check
      _
    $region27: #{_lambda_.1} parent=1 // pred_check_branch
      %78 = sbr.rel (0) target = $region29
    $region28: #{_lambda_.1} parent=1 // pred_region
      _
    $region29: #{_lambda_.1} parent=1 // pred_fallthru
      _
    // Predicated region
    $region30: #{_lambda_.1} parent=1 // pred_check
      _
    $region31: #{_lambda_.1} parent=1 // pred_check_branch
      %80 = sbr.rel (0) target = $region33
    $region32: #{_lambda_.1} parent=1 // pred_region
      %s82 = ssub.s32 1024, 1024
      %83 = vsyncadd [#allocation9], %s82
      %s84 = sshll.u32 [#allocation10], 4
      %s85 = int_to_ptr.vmem [resolvable:$true] %s84
      %90 = dma.hbm_to_vmem [thread:$0]  %s7, 1024, %s85, [#allocation9], 64, 64, 4
    $region33: #{_lambda_.1} parent=1 // pred_fallthru
      _
    // Predicated region
    $region34: #{_lambda_.1} parent=1 // pred_check
      _
    $region35: #{_lambda_.1} parent=1 // pred_check_branch
      %92 = sbr.rel (0) target = $region37
    $region36: #{_lambda_.1} parent=1 // pred_region
      _
    $region37: #{_lambda_.1} parent=1 // pred_fallthru
      _
    // Predicated region
    $region38: #{_lambda_.1} parent=1 // pred_check
      _
    $region39: #{_lambda_.1} parent=1 // pred_check_branch
      %94 = sbr.rel (0) target = $region41
    $region40: #{_lambda_.1} parent=1 // pred_region
      %s96 = ssub.s32 2048, 2048
      %97 = vsyncadd [#allocation12], %s96
      %s98 = sshll.u32 [#allocation11], 4
      %s99 = int_to_ptr.vmem [resolvable:$true] %s98
      %104 = dma.hbm_to_vmem [thread:$0]  %s9, 2048, %s99, [#allocation12], 128, 128, 8
    $region41: #{_lambda_.1} parent=1 // pred_fallthru
      _
    // Predicated region
    $region42: #{_lambda_.1} parent=1 // pred_check
      _
    $region43: #{_lambda_.1} parent=1 // pred_check_branch
      %106 = sbr.rel (0) target = $region45
    $region44: #{_lambda_.1} parent=1 // pred_region
      _
    $region45: #{_lambda_.1} parent=1 // pred_fallthru
      _
    // Predicated region
    $region46: #{_lambda_.1} parent=1 // pred_check
      _
    $region47: #{_lambda_.1} parent=1 // pred_check_branch
      %108 = sbr.rel (0) target = $region49
    $region48: #{_lambda_.1} parent=1 // pred_region
      %s110 = ssub.s32 2048, 2048
      %111 = vsyncadd [#allocation12], %s110
      %s112 = sshll.u32 [#allocation13], 4
      %s113 = int_to_ptr.vmem [resolvable:$true] %s112
      %118 = dma.hbm_to_vmem [thread:$0]  %s11, 2048, %s113, [#allocation12], 64, 64, 4
    $region49: #{_lambda_.1} parent=1 // pred_fallthru
      _
    // Predicated region
    $region50: #{_lambda_.1} parent=1 // pred_check
      _
    $region51: #{_lambda_.1} parent=1 // pred_check_branch
      %120 = sbr.rel (0) target = $region53
    $region52: #{_lambda_.1} parent=1 // pred_region
      _
    $region53: #{_lambda_.1} parent=1 // pred_fallthru
      _
    // Predicated region
    $region54: #{_lambda_.1} parent=1 // pred_check
      _
    $region55: #{_lambda_.1} parent=1 // pred_check_branch
      %122 = sbr.rel (0) target = $region57
    $region56: #{_lambda_.1} parent=1 // pred_region
      %123 = dma.done [#allocation3], 4096
    $region57: #{_lambda_.1} parent=1 // pred_fallthru
      _
    // Predicated region
    $region58: #{_lambda_.1} parent=1 // pred_check
      _
    $region59: #{_lambda_.1} parent=1 // pred_check_branch
      %125 = sbr.rel (0) target = $region61
    $region60: #{_lambda_.1} parent=1 // pred_region
      %126 = dma.done [#allocation6], 2048
    $region61: #{_lambda_.1} parent=1 // pred_fallthru
      _
    // Predicated region
    $region62: #{_lambda_.1} parent=1 // pred_check
      _
    $region63: #{_lambda_.1} parent=1 // pred_check_branch
      %128 = sbr.rel (0) target = $region65
    $region64: #{_lambda_.1} parent=1 // pred_region
      %129 = dma.done [#allocation6], 2048
    $region65: #{_lambda_.1} parent=1 // pred_fallthru
      _
    // Predicated region
    $region66: #{_lambda_.1} parent=1 // pred_check
      _
    $region67: #{_lambda_.1} parent=1 // pred_check_branch
      %131 = sbr.rel (0) target = $region69
    $region68: #{_lambda_.1} parent=1 // pred_region
      %132 = dma.done [#allocation9], 1024
    $region69: #{_lambda_.1} parent=1 // pred_fallthru
      _
    // Predicated region
    $region70: #{_lambda_.1} parent=1 // pred_check
      _
    $region71: #{_lambda_.1} parent=1 // pred_check_branch
      %134 = sbr.rel (0) target = $region73
    $region72: #{_lambda_.1} parent=1 // pred_region
      %135 = dma.done [#allocation9], 1024
    $region73: #{_lambda_.1} parent=1 // pred_fallthru
      _
    // Predicated region
    $region74: #{_lambda_.1} parent=1 // pred_check
      _
    $region75: #{_lambda_.1} parent=1 // pred_check_branch
      %137 = sbr.rel (0) target = $region77
    $region76: #{_lambda_.1} parent=1 // pred_region
      %138 = dma.done [#allocation12], 2048
    $region77: #{_lambda_.1} parent=1 // pred_fallthru
      _
    // Predicated region
    $region78: #{_lambda_.1} parent=1 // pred_check
      _
    $region79: #{_lambda_.1} parent=1 // pred_check_branch
      %140 = sbr.rel (0) target = $region81
    $region80: #{_lambda_.1} parent=1 // pred_region
      %141 = dma.done [#allocation12], 2048
    $region81: #{_lambda_.1} parent=1 // pred_fallthru
      _
    %v143 = vld [vmem:[#allocation2] sm:$0xff]
    %v144 = vld [vmem:[#allocation2 + $0x8] sm:$0xff]
    %v145 = vld [vmem:[#allocation2 + $0x10] sm:$0xff]
    %v146 = vld [vmem:[#allocation2 + $0x18] sm:$0xff]
    %v147 = vld [vmem:[#allocation2 + $0x20] sm:$0xff]
    %v148 = vld [vmem:[#allocation2 + $0x28] sm:$0xff]
    %v149 = vld [vmem:[#allocation2 + $0x30] sm:$0xff]
    %v150 = vld [vmem:[#allocation2 + $0x38] sm:$0xff]
    %v151 = vld [vmem:[#allocation2 + $0x40] sm:$0xff]
    %v152 = vld [vmem:[#allocation2 + $0x48] sm:$0xff]
    %v153 = vld [vmem:[#allocation2 + $0x50] sm:$0xff]
    %v154 = vld [vmem:[#allocation2 + $0x58] sm:$0xff]
    %v155 = vld [vmem:[#allocation2 + $0x60] sm:$0xff]
    %v156 = vld [vmem:[#allocation2 + $0x68] sm:$0xff]
    %v157 = vld [vmem:[#allocation2 + $0x70] sm:$0xff]
    %v158 = vld [vmem:[#allocation2 + $0x78] sm:$0xff]
    %v159 = vld [vmem:[#allocation2 + $0x80] sm:$0xff]
    %v160 = vld [vmem:[#allocation2 + $0x88] sm:$0xff]
    %v161 = vld [vmem:[#allocation2 + $0x90] sm:$0xff]
    %v162 = vld [vmem:[#allocation2 + $0x98] sm:$0xff]
    %v163 = vld [vmem:[#allocation2 + $0xa0] sm:$0xff]
    %v164 = vld [vmem:[#allocation2 + $0xa8] sm:$0xff]
    %v165 = vld [vmem:[#allocation2 + $0xb0] sm:$0xff]
    %v166 = vld [vmem:[#allocation2 + $0xb8] sm:$0xff]
    %v167 = vld [vmem:[#allocation2 + $0xc0] sm:$0xff]
    %v168 = vld [vmem:[#allocation2 + $0xc8] sm:$0xff]
    %v169 = vld [vmem:[#allocation2 + $0xd0] sm:$0xff]
    %v170 = vld [vmem:[#allocation2 + $0xd8] sm:$0xff]
    %v171 = vld [vmem:[#allocation2 + $0xe0] sm:$0xff]
    %v172 = vld [vmem:[#allocation2 + $0xe8] sm:$0xff]
    %v173 = vld [vmem:[#allocation2 + $0xf0] sm:$0xff]
    %v174 = vld [vmem:[#allocation2 + $0xf8] sm:$0xff]
    %v175 = vpack.c.bf16 %v144, %v143
    %v176 = vpack.c.bf16 %v146, %v145
    %v177 = vpack.c.bf16 %v148, %v147
    %v178 = vpack.c.bf16 %v150, %v149
    %v179 = vpack.c.bf16 %v152, %v151
    %v180 = vpack.c.bf16 %v154, %v153
    %v181 = vpack.c.bf16 %v156, %v155
    %v182 = vpack.c.bf16 %v158, %v157
    %v183 = vpack.c.bf16 %v160, %v159
    %v184 = vpack.c.bf16 %v162, %v161
    %v185 = vpack.c.bf16 %v164, %v163
    %v186 = vpack.c.bf16 %v166, %v165
    %v187 = vpack.c.bf16 %v168, %v167
    %v188 = vpack.c.bf16 %v170, %v169
    %v189 = vpack.c.bf16 %v172, %v171
    %v190 = vpack.c.bf16 %v174, %v173
    %v191 = vld [vmem:[%s2] sm:$0x3]
    %v192 = vld [vmem:[%s4] sm:$0x1]
    %v193 = vld [vmem:[%s6] sm:$0x1]
    %v194 = vld [vmem:[%s8] sm:$0x1]
    %v195 = vld [vmem:[%s10] sm:$0x3]
    %v196 = vld [vmem:[%s12] sm:$0x1]
    %v197 = vld [vmem:[#allocation5] sm:$0xff]
    %v198 = vld [vmem:[#allocation5 + $0x8] sm:$0xff]
    %v199 = vld [vmem:[#allocation5 + $0x10] sm:$0xff]
    %v200 = vld [vmem:[#allocation5 + $0x18] sm:$0xff]
    %v201 = vld [vmem:[#allocation5 + $0x20] sm:$0xff]
    %v202 = vld [vmem:[#allocation5 + $0x28] sm:$0xff]
    %v203 = vld [vmem:[#allocation5 + $0x30] sm:$0xff]
    %v204 = vld [vmem:[#allocation5 + $0x38] sm:$0xff]
    %v205 = vld [vmem:[#allocation5 + $0x40] sm:$0xff]
    %v206 = vld [vmem:[#allocation5 + $0x48] sm:$0xff]
    %v207 = vld [vmem:[#allocation5 + $0x50] sm:$0xff]
    %v208 = vld [vmem:[#allocation5 + $0x58] sm:$0xff]
    %v209 = vld [vmem:[#allocation5 + $0x60] sm:$0xff]
    %v210 = vld [vmem:[#allocation5 + $0x68] sm:$0xff]
    %v211 = vld [vmem:[#allocation5 + $0x70] sm:$0xff]
    %v212 = vld [vmem:[#allocation5 + $0x78] sm:$0xff]
    %v214 = vlaneseq
    %v215 = vshrl.u32 %v214, 7
    %v216 = vsub.s32 0, %v215
    %v217 = vrot.slane %v191, %v216
    %v218 = vlaneseq
    %v219 = vshrl.u32 %v218, 7
    %v220 = vsub.s32 1, %v219
    %v221 = vrot.slane %v191, %v220
    %v240 = vunpack.c.l.b16 %v197
    %v241 = vunpack.c.h.b16 %v197
    %v242 = vunpack.c.l.b16 %v198
    %v243 = vunpack.c.h.b16 %v198
    %v244 = vunpack.c.l.b16 %v199
    %v245 = vunpack.c.h.b16 %v199
    %v246 = vunpack.c.l.b16 %v200
    %v247 = vunpack.c.h.b16 %v200
    %v248 = vunpack.c.l.b16 %v201
    %v249 = vunpack.c.h.b16 %v201
    %v250 = vunpack.c.l.b16 %v202
    %v251 = vunpack.c.h.b16 %v202
    %v252 = vunpack.c.l.b16 %v203
    %v253 = vunpack.c.h.b16 %v203
    %v254 = vunpack.c.l.b16 %v204
    %v255 = vunpack.c.h.b16 %v204
    %v256 = vunpack.c.l.b16 %v205
    %v257 = vunpack.c.h.b16 %v205
    %v258 = vunpack.c.l.b16 %v206
    %v259 = vunpack.c.h.b16 %v206
    %v260 = vunpack.c.l.b16 %v207
    %v261 = vunpack.c.h.b16 %v207
    %v262 = vunpack.c.l.b16 %v208
    %v263 = vunpack.c.h.b16 %v208
    %v264 = vunpack.c.l.b16 %v209
    %v265 = vunpack.c.h.b16 %v209
    %v266 = vunpack.c.l.b16 %v210
    %v267 = vunpack.c.h.b16 %v210
    %v268 = vunpack.c.l.b16 %v211
    %v269 = vunpack.c.h.b16 %v211
    %v270 = vunpack.c.l.b16 %v212
    %v271 = vunpack.c.h.b16 %v212
    %v272 = vpack.c.b16 %v242, %v240
    %v273 = vpack.c.b16 %v243, %v241
    %v274 = vpack.c.b16 %v246, %v244
    %v275 = vpack.c.b16 %v247, %v245
    %v276 = vpack.c.b16 %v250, %v248
    %v277 = vpack.c.b16 %v251, %v249
    %v278 = vpack.c.b16 %v254, %v252
    %v279 = vpack.c.b16 %v255, %v253
    %v280 = vpack.c.b16 %v258, %v256
    %v281 = vpack.c.b16 %v259, %v257
    %v282 = vpack.c.b16 %v262, %v260
    %v283 = vpack.c.b16 %v263, %v261
    %v284 = vpack.c.b16 %v266, %v264
    %v285 = vpack.c.b16 %v267, %v265
    %v286 = vpack.c.b16 %v270, %v268
    %v287 = vpack.c.b16 %v271, %v269
    %304 = vmatprep.subr.bf16.mxu0 %v273
    %305 = vmatpush1.bf16.msra.mxu0 %v272
    %306 = vmatprep.subr.bf16.mxu0 %v275
    %307 = vmatpush1.bf16.msra.mxu0 %v274
    %308 = vmatprep.subr.bf16.mxu0 %v277
    %309 = vmatpush1.bf16.msra.mxu0 %v276
    %310 = vmatprep.subr.bf16.mxu0 %v279
    %311 = vmatpush1.bf16.msra.mxu0 %v278
    %312 = vmatprep.subr.bf16.mxu0 %v281
    %313 = vmatpush1.bf16.msra.mxu0 %v280
    %314 = vmatprep.subr.bf16.mxu0 %v283
    %315 = vmatpush1.bf16.msra.mxu0 %v282
    %316 = vmatprep.subr.bf16.mxu0 %v285
    %317 = vmatpush1.bf16.msra.mxu0 %v284
    %318 = vmatprep.subr.bf16.mxu0 %v287
    %319 = vmatpush1.bf16.msra.mxu0 %v286
    %320 = vmatprep.subr.bf16.mxu0 0
    %321 = vmatpush1.bf16.msra.mxu0 0
    %322 = vmatprep.subr.bf16.mxu0 0
    %323 = vmatpush1.bf16.msra.mxu0 0
    %324 = vmatprep.subr.bf16.mxu0 0
    %325 = vmatpush1.bf16.msra.mxu0 0
    %326 = vmatprep.subr.bf16.mxu0 0
    %327 = vmatpush1.bf16.msra.mxu0 0
    %328 = vmatprep.subr.bf16.mxu0 0
    %329 = vmatpush1.bf16.msra.mxu0 0
    %330 = vmatprep.subr.bf16.mxu0 0
    %331 = vmatpush1.bf16.msra.mxu0 0
    %332 = vmatprep.subr.bf16.mxu0 0
    %333 = vmatpush1.bf16.msra.mxu0 0
    %334 = vmatprep.subr.bf16.mxu0 0
    %335 = vmatpush1.bf16.msra.mxu0 0
    %336 = vmatprep.mubr.bf16.mxu0 0
    %337 = vmatmul.mubr.bf16.gmra.mrb[0].mxu0 %v175
    %v338 = vpop.f32.mrb[0].mxu0
    %v339 = vadd.f32 %v217, %v338
    %v340 = vpop.f32.mrb[0].mxu0
    %v341 = vadd.f32 %v221, %v340
    %v342 = vpop.f32.mrb[0].mxu0
    %v343 = vadd.f32 %v217, %v342
    %v344 = vpop.f32.mrb[0].mxu0
    %v345 = vadd.f32 %v221, %v344
    %346 = vmatprep.mubr.bf16.mxu0 0
    %347 = vmatmul.mubr.bf16.gmra.mrb[0].mxu0 %v176
    %v348 = vpop.f32.mrb[0].mxu0
    %v349 = vadd.f32 %v217, %v348
    %v350 = vpop.f32.mrb[0].mxu0
    %v351 = vadd.f32 %v221, %v350
    %v352 = vpop.f32.mrb[0].mxu0
    %v353 = vadd.f32 %v217, %v352
    %v354 = vpop.f32.mrb[0].mxu0
    %v355 = vadd.f32 %v221, %v354
    %356 = vmatprep.mubr.bf16.mxu0 0
    %357 = vmatmul.mubr.bf16.gmra.mrb[0].mxu0 %v177
    %v358 = vpop.f32.mrb[0].mxu0
    %v359 = vadd.f32 %v217, %v358
    %v360 = vpop.f32.mrb[0].mxu0
    %v361 = vadd.f32 %v221, %v360
    %v362 = vpop.f32.mrb[0].mxu0
    %v363 = vadd.f32 %v217, %v362
    %v364 = vpop.f32.mrb[0].mxu0
    %v365 = vadd.f32 %v221, %v364
    %366 = vmatprep.mubr.bf16.mxu0 0
    %367 = vmatmul.mubr.bf16.gmra.mrb[0].mxu0 %v178
    %v368 = vpop.f32.mrb[0].mxu0
    %v369 = vadd.f32 %v217, %v368
    %v370 = vpop.f32.mrb[0].mxu0
    %v371 = vadd.f32 %v221, %v370
    %v372 = vpop.f32.mrb[0].mxu0
    %v373 = vadd.f32 %v217, %v372
    %v374 = vpop.f32.mrb[0].mxu0
    %v375 = vadd.f32 %v221, %v374
    %376 = vmatprep.mubr.bf16.mxu0 0
    %377 = vmatmul.mubr.bf16.gmra.mrb[0].mxu0 %v179
    %v378 = vpop.f32.mrb[0].mxu0
    %v379 = vadd.f32 %v217, %v378
    %v380 = vpop.f32.mrb[0].mxu0
    %v381 = vadd.f32 %v221, %v380
    %v382 = vpop.f32.mrb[0].mxu0
    %v383 = vadd.f32 %v217, %v382
    %v384 = vpop.f32.mrb[0].mxu0
    %v385 = vadd.f32 %v221, %v384
    %386 = vmatprep.mubr.bf16.mxu0 0
    %387 = vmatmul.mubr.bf16.gmra.mrb[0].mxu0 %v180
    %v388 = vpop.f32.mrb[0].mxu0
    %v389 = vadd.f32 %v217, %v388
    %v390 = vpop.f32.mrb[0].mxu0
    %v391 = vadd.f32 %v221, %v390
    %v392 = vpop.f32.mrb[0].mxu0
    %v393 = vadd.f32 %v217, %v392
    %v394 = vpop.f32.mrb[0].mxu0
    %v395 = vadd.f32 %v221, %v394
    %396 = vmatprep.mubr.bf16.mxu0 0
    %397 = vmatmul.mubr.bf16.gmra.mrb[0].mxu0 %v181
    %v398 = vpop.f32.mrb[0].mxu0
    %v399 = vadd.f32 %v217, %v398
    %v400 = vpop.f32.mrb[0].mxu0
    %v401 = vadd.f32 %v221, %v400
    %v402 = vpop.f32.mrb[0].mxu0
    %v403 = vadd.f32 %v217, %v402
    %v404 = vpop.f32.mrb[0].mxu0
    %v405 = vadd.f32 %v221, %v404
    %406 = vmatprep.mubr.bf16.mxu0 0
    %407 = vmatmul.mubr.bf16.gmra.mrb[0].mxu0 %v182
    %v408 = vpop.f32.mrb[0].mxu0
    %v409 = vadd.f32 %v217, %v408
    %v410 = vpop.f32.mrb[0].mxu0
    %v411 = vadd.f32 %v221, %v410
    %v412 = vpop.f32.mrb[0].mxu0
    %v413 = vadd.f32 %v217, %v412
    %v414 = vpop.f32.mrb[0].mxu0
    %v415 = vadd.f32 %v221, %v414
    %416 = vmatprep.mubr.bf16.mxu0 0
    %417 = vmatmul.mubr.bf16.gmra.mrb[0].mxu0 %v183
    %v418 = vpop.f32.mrb[0].mxu0
    %v419 = vadd.f32 %v217, %v418
    %v420 = vpop.f32.mrb[0].mxu0
    %v421 = vadd.f32 %v221, %v420
    %v422 = vpop.f32.mrb[0].mxu0
    %v423 = vadd.f32 %v217, %v422
    %v424 = vpop.f32.mrb[0].mxu0
    %v425 = vadd.f32 %v221, %v424
    %426 = vmatprep.mubr.bf16.mxu0 0
    %427 = vmatmul.mubr.bf16.gmra.mrb[0].mxu0 %v184
    %v428 = vpop.f32.mrb[0].mxu0
    %v429 = vadd.f32 %v217, %v428
    %v430 = vpop.f32.mrb[0].mxu0
    %v431 = vadd.f32 %v221, %v430
    %v432 = vpop.f32.mrb[0].mxu0
    %v433 = vadd.f32 %v217, %v432
    %v434 = vpop.f32.mrb[0].mxu0
    %v435 = vadd.f32 %v221, %v434
    %436 = vmatprep.mubr.bf16.mxu0 0
    %437 = vmatmul.mubr.bf16.gmra.mrb[0].mxu0 %v185
    %v438 = vpop.f32.mrb[0].mxu0
    %v439 = vadd.f32 %v217, %v438
    %v440 = vpop.f32.mrb[0].mxu0
    %v441 = vadd.f32 %v221, %v440
    %v442 = vpop.f32.mrb[0].mxu0
    %v443 = vadd.f32 %v217, %v442
    %v444 = vpop.f32.mrb[0].mxu0
    %v445 = vadd.f32 %v221, %v444
    %446 = vmatprep.mubr.bf16.mxu0 0
    %447 = vmatmul.mubr.bf16.gmra.mrb[0].mxu0 %v186
    %v448 = vpop.f32.mrb[0].mxu0
    %v449 = vadd.f32 %v217, %v448
    %v450 = vpop.f32.mrb[0].mxu0
    %v451 = vadd.f32 %v221, %v450
    %v452 = vpop.f32.mrb[0].mxu0
    %v453 = vadd.f32 %v217, %v452
    %v454 = vpop.f32.mrb[0].mxu0
    %v455 = vadd.f32 %v221, %v454
    %456 = vmatprep.mubr.bf16.mxu0 0
    %457 = vmatmul.mubr.bf16.gmra.mrb[0].mxu0 %v187
    %v458 = vpop.f32.mrb[0].mxu0
    %v459 = vadd.f32 %v217, %v458
    %v460 = vpop.f32.mrb[0].mxu0
    %v461 = vadd.f32 %v221, %v460
    %v462 = vpop.f32.mrb[0].mxu0
    %v463 = vadd.f32 %v217, %v462
    %v464 = vpop.f32.mrb[0].mxu0
    %v465 = vadd.f32 %v221, %v464
    %466 = vmatprep.mubr.bf16.mxu0 0
    %467 = vmatmul.mubr.bf16.gmra.mrb[0].mxu0 %v188
    %v468 = vpop.f32.mrb[0].mxu0
    %v469 = vadd.f32 %v217, %v468
    %v470 = vpop.f32.mrb[0].mxu0
    %v471 = vadd.f32 %v221, %v470
    %v472 = vpop.f32.mrb[0].mxu0
    %v473 = vadd.f32 %v217, %v472
    %v474 = vpop.f32.mrb[0].mxu0
    %v475 = vadd.f32 %v221, %v474
    %476 = vmatprep.mubr.bf16.mxu0 0
    %477 = vmatmul.mubr.bf16.gmra.mrb[0].mxu0 %v189
    %v478 = vpop.f32.mrb[0].mxu0
    %v479 = vadd.f32 %v217, %v478
    %v480 = vpop.f32.mrb[0].mxu0
    %v481 = vadd.f32 %v221, %v480
    %v482 = vpop.f32.mrb[0].mxu0
    %v483 = vadd.f32 %v217, %v482
    %v484 = vpop.f32.mrb[0].mxu0
    %v485 = vadd.f32 %v221, %v484
    %486 = vmatprep.mubr.bf16.mxu0 0
    %487 = vmatmul.mubr.bf16.gmra.mrb[0].mxu0 %v190
    %v488 = vpop.f32.mrb[0].mxu0
    %v489 = vadd.f32 %v217, %v488
    %v490 = vpop.f32.mrb[0].mxu0
    %v491 = vadd.f32 %v221, %v490
    %v492 = vpop.f32.mrb[0].mxu0
    %v493 = vadd.f32 %v217, %v492
    %v494 = vpop.f32.mrb[0].mxu0
    %v495 = vadd.f32 %v221, %v494
    %496 = vdwg.mxu0
    %v497 = vmax.f32 %v339, 0.0
    %v498 = vmax.f32 %v341, 0.0
    %v499 = vmax.f32 %v343, 0.0
    %v500 = vmax.f32 %v345, 0.0
    %v501 = vmax.f32 %v349, 0.0
    %v502 = vmax.f32 %v351, 0.0
    %v503 = vmax.f32 %v353, 0.0
    %v504 = vmax.f32 %v355, 0.0
    %v505 = vmax.f32 %v359, 0.0
    %v506 = vmax.f32 %v361, 0.0
    %v507 = vmax.f32 %v363, 0.0
    %v508 = vmax.f32 %v365, 0.0
    %v509 = vmax.f32 %v369, 0.0
    %v510 = vmax.f32 %v371, 0.0
    %v511 = vmax.f32 %v373, 0.0
    %v512 = vmax.f32 %v375, 0.0
    %v513 = vmax.f32 %v379, 0.0
    %v514 = vmax.f32 %v381, 0.0
    %v515 = vmax.f32 %v383, 0.0
    %v516 = vmax.f32 %v385, 0.0
    %v517 = vmax.f32 %v389, 0.0
    %v518 = vmax.f32 %v391, 0.0
    %v519 = vmax.f32 %v393, 0.0
    %v520 = vmax.f32 %v395, 0.0
    %v521 = vmax.f32 %v399, 0.0
    %v522 = vmax.f32 %v401, 0.0
    %v523 = vmax.f32 %v403, 0.0
    %v524 = vmax.f32 %v405, 0.0
    %v525 = vmax.f32 %v409, 0.0
    %v526 = vmax.f32 %v411, 0.0
    %v527 = vmax.f32 %v413, 0.0
    %v528 = vmax.f32 %v415, 0.0
    %v529 = vmax.f32 %v419, 0.0
    %v530 = vmax.f32 %v421, 0.0
    %v531 = vmax.f32 %v423, 0.0
    %v532 = vmax.f32 %v425, 0.0
    %v533 = vmax.f32 %v429, 0.0
    %v534 = vmax.f32 %v431, 0.0
    %v535 = vmax.f32 %v433, 0.0
    %v536 = vmax.f32 %v435, 0.0
    %v537 = vmax.f32 %v439, 0.0
    %v538 = vmax.f32 %v441, 0.0
    %v539 = vmax.f32 %v443, 0.0
    %v540 = vmax.f32 %v445, 0.0
    %v541 = vmax.f32 %v449, 0.0
    %v542 = vmax.f32 %v451, 0.0
    %v543 = vmax.f32 %v453, 0.0
    %v544 = vmax.f32 %v455, 0.0
    %v545 = vmax.f32 %v459, 0.0
    %v546 = vmax.f32 %v461, 0.0
    %v547 = vmax.f32 %v463, 0.0
    %v548 = vmax.f32 %v465, 0.0
    %v549 = vmax.f32 %v469, 0.0
    %v550 = vmax.f32 %v471, 0.0
    %v551 = vmax.f32 %v473, 0.0
    %v552 = vmax.f32 %v475, 0.0
    %v553 = vmax.f32 %v479, 0.0
    %v554 = vmax.f32 %v481, 0.0
    %v555 = vmax.f32 %v483, 0.0
    %v556 = vmax.f32 %v485, 0.0
    %v557 = vmax.f32 %v489, 0.0
    %v558 = vmax.f32 %v491, 0.0
    %v559 = vmax.f32 %v493, 0.0
    %v560 = vmax.f32 %v495, 0.0
    %v561 = vpack.c.bf16 %v499, %v497
    %v562 = vpack.c.bf16 %v500, %v498
    %v563 = vpack.c.bf16 %v503, %v501
    %v564 = vpack.c.bf16 %v504, %v502
    %v565 = vpack.c.bf16 %v507, %v505
    %v566 = vpack.c.bf16 %v508, %v506
    %v567 = vpack.c.bf16 %v511, %v509
    %v568 = vpack.c.bf16 %v512, %v510
    %v569 = vpack.c.bf16 %v515, %v513
    %v570 = vpack.c.bf16 %v516, %v514
    %v571 = vpack.c.bf16 %v519, %v517
    %v572 = vpack.c.bf16 %v520, %v518
    %v573 = vpack.c.bf16 %v523, %v521
    %v574 = vpack.c.bf16 %v524, %v522
    %v575 = vpack.c.bf16 %v527, %v525
    %v576 = vpack.c.bf16 %v528, %v526
    %v577 = vpack.c.bf16 %v531, %v529
    %v578 = vpack.c.bf16 %v532, %v530
    %v579 = vpack.c.bf16 %v535, %v533
    %v580 = vpack.c.bf16 %v536, %v534
    %v581 = vpack.c.bf16 %v539, %v537
    %v582 = vpack.c.bf16 %v540, %v538
    %v583 = vpack.c.bf16 %v543, %v541
    %v584 = vpack.c.bf16 %v544, %v542
    %v585 = vpack.c.bf16 %v547, %v545
    %v586 = vpack.c.bf16 %v548, %v546
    %v587 = vpack.c.bf16 %v551, %v549
    %v588 = vpack.c.bf16 %v552, %v550
    %v589 = vpack.c.bf16 %v555, %v553
    %v590 = vpack.c.bf16 %v556, %v554
    %v591 = vpack.c.bf16 %v559, %v557
    %v592 = vpack.c.bf16 %v560, %v558
    %v593 = vld [vmem:[#allocation7] sm:$0xf]
    %v594 = vld [vmem:[#allocation7 + $0x4] sm:$0xf]
    %v595 = vld [vmem:[#allocation7 + $0x8] sm:$0xf]
    %v596 = vld [vmem:[#allocation7 + $0xc] sm:$0xf]
    %v597 = vld [vmem:[#allocation7 + $0x10] sm:$0xf]
    %v598 = vld [vmem:[#allocation7 + $0x14] sm:$0xf]
    %v599 = vld [vmem:[#allocation7 + $0x18] sm:$0xf]
    %v600 = vld [vmem:[#allocation7 + $0x1c] sm:$0xf]
    %v601 = vld [vmem:[#allocation7 + $0x20] sm:$0xf]
    %v602 = vld [vmem:[#allocation7 + $0x24] sm:$0xf]
    %v603 = vld [vmem:[#allocation7 + $0x28] sm:$0xf]
    %v604 = vld [vmem:[#allocation7 + $0x2c] sm:$0xf]
    %v605 = vld [vmem:[#allocation7 + $0x30] sm:$0xf]
    %v606 = vld [vmem:[#allocation7 + $0x34] sm:$0xf]
    %v607 = vld [vmem:[#allocation7 + $0x38] sm:$0xf]
    %v608 = vld [vmem:[#allocation7 + $0x3c] sm:$0xf]
    %v609 = vld [vmem:[#allocation7 + $0x40] sm:$0xf]
    %v610 = vld [vmem:[#allocation7 + $0x44] sm:$0xf]
    %v611 = vld [vmem:[#allocation7 + $0x48] sm:$0xf]
    %v612 = vld [vmem:[#allocation7 + $0x4c] sm:$0xf]
    %v613 = vld [vmem:[#allocation7 + $0x50] sm:$0xf]
    %v614 = vld [vmem:[#allocation7 + $0x54] sm:$0xf]
    %v615 = vld [vmem:[#allocation7 + $0x58] sm:$0xf]
    %v616 = vld [vmem:[#allocation7 + $0x5c] sm:$0xf]
    %v617 = vld [vmem:[#allocation7 + $0x60] sm:$0xf]
    %v618 = vld [vmem:[#allocation7 + $0x64] sm:$0xf]
    %v619 = vld [vmem:[#allocation7 + $0x68] sm:$0xf]
    %v620 = vld [vmem:[#allocation7 + $0x6c] sm:$0xf]
    %v621 = vld [vmem:[#allocation7 + $0x70] sm:$0xf]
    %v622 = vld [vmem:[#allocation7 + $0x74] sm:$0xf]
    %v623 = vld [vmem:[#allocation7 + $0x78] sm:$0xf]
    %v624 = vld [vmem:[#allocation7 + $0x7c] sm:$0xf]
    %v626 = vlaneseq
    %v627 = vshrl.u32 %v626, 7
    %v628 = vsub.s32 0, %v627
    %v629 = vrot.slane %v192, %v628
    %v663 = vunpack.c.l.b16 %v593
    %v664 = vunpack.c.l.b16 %v594
    %v665 = vunpack.c.l.b16 %v595
    %v666 = vunpack.c.l.b16 %v596
    %v667 = vunpack.c.l.b16 %v597
    %v668 = vunpack.c.l.b16 %v598
    %v669 = vunpack.c.l.b16 %v599
    %v670 = vunpack.c.l.b16 %v600
    %v671 = vunpack.c.l.b16 %v601
    %v672 = vunpack.c.l.b16 %v602
    %v673 = vunpack.c.l.b16 %v603
    %v674 = vunpack.c.l.b16 %v604
    %v675 = vunpack.c.l.b16 %v605
    %v676 = vunpack.c.l.b16 %v606
    %v677 = vunpack.c.l.b16 %v607
    %v678 = vunpack.c.l.b16 %v608
    %v679 = vunpack.c.l.b16 %v609
    %v680 = vunpack.c.l.b16 %v610
    %v681 = vunpack.c.l.b16 %v611
    %v682 = vunpack.c.l.b16 %v612
    %v683 = vunpack.c.l.b16 %v613
    %v684 = vunpack.c.l.b16 %v614
    %v685 = vunpack.c.l.b16 %v615
    %v686 = vunpack.c.l.b16 %v616
    %v687 = vunpack.c.l.b16 %v617
    %v688 = vunpack.c.l.b16 %v618
    %v689 = vunpack.c.l.b16 %v619
    %v690 = vunpack.c.l.b16 %v620
    %v691 = vunpack.c.l.b16 %v621
    %v692 = vunpack.c.l.b16 %v622
    %v693 = vunpack.c.l.b16 %v623
    %v694 = vunpack.c.l.b16 %v624
    %v695 = vpack.c.b16 %v664, %v663
    %v696 = vpack.c.b16 %v666, %v665
    %v697 = vpack.c.b16 %v668, %v667
    %v698 = vpack.c.b16 %v670, %v669
    %v699 = vpack.c.b16 %v672, %v671
    %v700 = vpack.c.b16 %v674, %v673
    %v701 = vpack.c.b16 %v676, %v675
    %v702 = vpack.c.b16 %v678, %v677
    %v703 = vpack.c.b16 %v680, %v679
    %v704 = vpack.c.b16 %v682, %v681
    %v705 = vpack.c.b16 %v684, %v683
    %v706 = vpack.c.b16 %v686, %v685
    %v707 = vpack.c.b16 %v688, %v687
    %v708 = vpack.c.b16 %v690, %v689
    %v709 = vpack.c.b16 %v692, %v691
    %v710 = vpack.c.b16 %v694, %v693
    %727 = vmatprep.subr.bf16.mxu0 0
    %728 = vmatpush1.bf16.msra.mxu0 %v695
    %729 = vmatprep.subr.bf16.mxu0 0
    %730 = vmatpush1.bf16.msra.mxu0 %v696
    %731 = vmatprep.subr.bf16.mxu0 0
    %732 = vmatpush1.bf16.msra.mxu0 %v697
    %733 = vmatprep.subr.bf16.mxu0 0
    %734 = vmatpush1.bf16.msra.mxu0 %v698
    %735 = vmatprep.subr.bf16.mxu0 0
    %736 = vmatpush1.bf16.msra.mxu0 %v699
    %737 = vmatprep.subr.bf16.mxu0 0
    %738 = vmatpush1.bf16.msra.mxu0 %v700
    %739 = vmatprep.subr.bf16.mxu0 0
    %740 = vmatpush1.bf16.msra.mxu0 %v701
    %741 = vmatprep.subr.bf16.mxu0 0
    %742 = vmatpush1.bf16.msra.mxu0 %v702
    %743 = vmatprep.subr.bf16.mxu0 0
    %744 = vmatpush1.bf16.msra.mxu0 %v703
    %745 = vmatprep.subr.bf16.mxu0 0
    %746 = vmatpush1.bf16.msra.mxu0 %v704
    %747 = vmatprep.subr.bf16.mxu0 0
    %748 = vmatpush1.bf16.msra.mxu0 %v705
    %749 = vmatprep.subr.bf16.mxu0 0
    %750 = vmatpush1.bf16.msra.mxu0 %v706
    %751 = vmatprep.subr.bf16.mxu0 0
    %752 = vmatpush1.bf16.msra.mxu0 %v707
    %753 = vmatprep.subr.bf16.mxu0 0
    %754 = vmatpush1.bf16.msra.mxu0 %v708
    %755 = vmatprep.subr.bf16.mxu0 0
    %756 = vmatpush1.bf16.msra.mxu0 %v709
    %757 = vmatprep.subr.bf16.mxu0 0
    %758 = vmatpush1.bf16.msra.mxu0 %v710
    %759 = vmatprep.mubr.bf16.mxu0 %v562
    %760 = vmatmul.mubr.bf16.gmra.mrb[0].mxu0 %v561
    %v761 = vpop.f32.mrb[0].mxu0
    %v762 = vadd.f32 %v629, %v761
    %v763 = vpop.f32.mrb[0].mxu0
    %v764 = vpop.f32.mrb[0].mxu0
    %v765 = vadd.f32 %v629, %v764
    %v766 = vpop.f32.mrb[0].mxu0
    %767 = vmatprep.mubr.bf16.mxu0 %v564
    %768 = vmatmul.mubr.bf16.gmra.mrb[0].mxu0 %v563
    %v769 = vpop.f32.mrb[0].mxu0
    %v770 = vadd.f32 %v629, %v769
    %v771 = vpop.f32.mrb[0].mxu0
    %v772 = vpop.f32.mrb[0].mxu0
    %v773 = vadd.f32 %v629, %v772
    %v774 = vpop.f32.mrb[0].mxu0
    %775 = vmatprep.mubr.bf16.mxu0 %v566
    %776 = vmatmul.mubr.bf16.gmra.mrb[0].mxu0 %v565
    %v777 = vpop.f32.mrb[0].mxu0
    %v778 = vadd.f32 %v629, %v777
    %v779 = vpop.f32.mrb[0].mxu0
    %v780 = vpop.f32.mrb[0].mxu0
    %v781 = vadd.f32 %v629, %v780
    %v782 = vpop.f32.mrb[0].mxu0
    %783 = vmatprep.mubr.bf16.mxu0 %v568
    %784 = vmatmul.mubr.bf16.gmra.mrb[0].mxu0 %v567
    %v785 = vpop.f32.mrb[0].mxu0
    %v786 = vadd.f32 %v629, %v785
    %v787 = vpop.f32.mrb[0].mxu0
    %v788 = vpop.f32.mrb[0].mxu0
    %v789 = vadd.f32 %v629, %v788
    %v790 = vpop.f32.mrb[0].mxu0
    %791 = vmatprep.mubr.bf16.mxu0 %v570
    %792 = vmatmul.mubr.bf16.gmra.mrb[0].mxu0 %v569
    %v793 = vpop.f32.mrb[0].mxu0
    %v794 = vadd.f32 %v629, %v793
    %v795 = vpop.f32.mrb[0].mxu0
    %v796 = vpop.f32.mrb[0].mxu0
    %v797 = vadd.f32 %v629, %v796
    %v798 = vpop.f32.mrb[0].mxu0
    %799 = vmatprep.mubr.bf16.mxu0 %v572
    %800 = vmatmul.mubr.bf16.gmra.mrb[0].mxu0 %v571
    %v801 = vpop.f32.mrb[0].mxu0
    %v802 = vadd.f32 %v629, %v801
    %v803 = vpop.f32.mrb[0].mxu0
    %v804 = vpop.f32.mrb[0].mxu0
    %v805 = vadd.f32 %v629, %v804
    %v806 = vpop.f32.mrb[0].mxu0
    %807 = vmatprep.mubr.bf16.mxu0 %v574
    %808 = vmatmul.mubr.bf16.gmra.mrb[0].mxu0 %v573
    %v809 = vpop.f32.mrb[0].mxu0
    %v810 = vadd.f32 %v629, %v809
    %v811 = vpop.f32.mrb[0].mxu0
    %v812 = vpop.f32.mrb[0].mxu0
    %v813 = vadd.f32 %v629, %v812
    %v814 = vpop.f32.mrb[0].mxu0
    %815 = vmatprep.mubr.bf16.mxu0 %v576
    %816 = vmatmul.mubr.bf16.gmra.mrb[0].mxu0 %v575
    %v817 = vpop.f32.mrb[0].mxu0
    %v818 = vadd.f32 %v629, %v817
    %v819 = vpop.f32.mrb[0].mxu0
    %v820 = vpop.f32.mrb[0].mxu0
    %v821 = vadd.f32 %v629, %v820
    %v822 = vpop.f32.mrb[0].mxu0
    %823 = vmatprep.mubr.bf16.mxu0 %v578
    %824 = vmatmul.mubr.bf16.gmra.mrb[0].mxu0 %v577
    %v825 = vpop.f32.mrb[0].mxu0
    %v826 = vadd.f32 %v629, %v825
    %v827 = vpop.f32.mrb[0].mxu0
    %v828 = vpop.f32.mrb[0].mxu0
    %v829 = vadd.f32 %v629, %v828
    %v830 = vpop.f32.mrb[0].mxu0
    %831 = vmatprep.mubr.bf16.mxu0 %v580
    %832 = vmatmul.mubr.bf16.gmra.mrb[0].mxu0 %v579
    %v833 = vpop.f32.mrb[0].mxu0
    %v834 = vadd.f32 %v629, %v833
    %v835 = vpop.f32.mrb[0].mxu0
    %v836 = vpop.f32.mrb[0].mxu0
    %v837 = vadd.f32 %v629, %v836
    %v838 = vpop.f32.mrb[0].mxu0
    %839 = vmatprep.mubr.bf16.mxu0 %v582
    %840 = vmatmul.mubr.bf16.gmra.mrb[0].mxu0 %v581
    %v841 = vpop.f32.mrb[0].mxu0
    %v842 = vadd.f32 %v629, %v841
    %v843 = vpop.f32.mrb[0].mxu0
    %v844 = vpop.f32.mrb[0].mxu0
    %v845 = vadd.f32 %v629, %v844
    %v846 = vpop.f32.mrb[0].mxu0
    %847 = vmatprep.mubr.bf16.mxu0 %v584
    %848 = vmatmul.mubr.bf16.gmra.mrb[0].mxu0 %v583
    %v849 = vpop.f32.mrb[0].mxu0
    %v850 = vadd.f32 %v629, %v849
    %v851 = vpop.f32.mrb[0].mxu0
    %v852 = vpop.f32.mrb[0].mxu0
    %v853 = vadd.f32 %v629, %v852
    %v854 = vpop.f32.mrb[0].mxu0
    %855 = vmatprep.mubr.bf16.mxu0 %v586
    %856 = vmatmul.mubr.bf16.gmra.mrb[0].mxu0 %v585
    %v857 = vpop.f32.mrb[0].mxu0
    %v858 = vadd.f32 %v629, %v857
    %v859 = vpop.f32.mrb[0].mxu0
    %v860 = vpop.f32.mrb[0].mxu0
    %v861 = vadd.f32 %v629, %v860
    %v862 = vpop.f32.mrb[0].mxu0
    %863 = vmatprep.mubr.bf16.mxu0 %v588
    %864 = vmatmul.mubr.bf16.gmra.mrb[0].mxu0 %v587
    %v865 = vpop.f32.mrb[0].mxu0
    %v866 = vadd.f32 %v629, %v865
    %v867 = vpop.f32.mrb[0].mxu0
    %v868 = vpop.f32.mrb[0].mxu0
    %v869 = vadd.f32 %v629, %v868
    %v870 = vpop.f32.mrb[0].mxu0
    %871 = vmatprep.mubr.bf16.mxu0 %v590
    %872 = vmatmul.mubr.bf16.gmra.mrb[0].mxu0 %v589
    %v873 = vpop.f32.mrb[0].mxu0
    %v874 = vadd.f32 %v629, %v873
    %v875 = vpop.f32.mrb[0].mxu0
    %v876 = vpop.f32.mrb[0].mxu0
    %v877 = vadd.f32 %v629, %v876
    %v878 = vpop.f32.mrb[0].mxu0
    %879 = vmatprep.mubr.bf16.mxu0 %v592
    %880 = vmatmul.mubr.bf16.gmra.mrb[0].mxu0 %v591
    %v881 = vpop.f32.mrb[0].mxu0
    %v882 = vadd.f32 %v629, %v881
    %v883 = vpop.f32.mrb[0].mxu0
    %v884 = vpop.f32.mrb[0].mxu0
    %v885 = vadd.f32 %v629, %v884
    %v886 = vpop.f32.mrb[0].mxu0
    %887 = vdwg.mxu0
    %v888 = vmax.f32 %v762, 0.0
    %v889 = vmax.f32 %v765, 0.0
    %v890 = vmax.f32 %v770, 0.0
    %v891 = vmax.f32 %v773, 0.0
    %v892 = vmax.f32 %v778, 0.0
    %v893 = vmax.f32 %v781, 0.0
    %v894 = vmax.f32 %v786, 0.0
    %v895 = vmax.f32 %v789, 0.0
    %v896 = vmax.f32 %v794, 0.0
    %v897 = vmax.f32 %v797, 0.0
    %v898 = vmax.f32 %v802, 0.0
    %v899 = vmax.f32 %v805, 0.0
    %v900 = vmax.f32 %v810, 0.0
    %v901 = vmax.f32 %v813, 0.0
    %v902 = vmax.f32 %v818, 0.0
    %v903 = vmax.f32 %v821, 0.0
    %v904 = vmax.f32 %v826, 0.0
    %v905 = vmax.f32 %v829, 0.0
    %v906 = vmax.f32 %v834, 0.0
    %v907 = vmax.f32 %v837, 0.0
    %v908 = vmax.f32 %v842, 0.0
    %v909 = vmax.f32 %v845, 0.0
    %v910 = vmax.f32 %v850, 0.0
    %v911 = vmax.f32 %v853, 0.0
    %v912 = vmax.f32 %v858, 0.0
    %v913 = vmax.f32 %v861, 0.0
    %v914 = vmax.f32 %v866, 0.0
    %v915 = vmax.f32 %v869, 0.0
    %v916 = vmax.f32 %v874, 0.0
    %v917 = vmax.f32 %v877, 0.0
    %v918 = vmax.f32 %v882, 0.0
    %v919 = vmax.f32 %v885, 0.0
    %v920 = vpack.c.bf16 %v889, %v888
    %v921 = vpack.c.bf16 %v891, %v890
    %v922 = vpack.c.bf16 %v893, %v892
    %v923 = vpack.c.bf16 %v895, %v894
    %v924 = vpack.c.bf16 %v897, %v896
    %v925 = vpack.c.bf16 %v899, %v898
    %v926 = vpack.c.bf16 %v901, %v900
    %v927 = vpack.c.bf16 %v903, %v902
    %v928 = vpack.c.bf16 %v905, %v904
    %v929 = vpack.c.bf16 %v907, %v906
    %v930 = vpack.c.bf16 %v909, %v908
    %v931 = vpack.c.bf16 %v911, %v910
    %v932 = vpack.c.bf16 %v913, %v912
    %v933 = vpack.c.bf16 %v915, %v914
    %v934 = vpack.c.bf16 %v917, %v916
    %v935 = vpack.c.bf16 %v919, %v918
    %v936 = vld [vmem:[#allocation8] sm:$0xf]
    %v937 = vld [vmem:[#allocation8 + $0x4] sm:$0xf]
    %v938 = vld [vmem:[#allocation8 + $0x8] sm:$0xf]
    %v939 = vld [vmem:[#allocation8 + $0xc] sm:$0xf]
    %v940 = vld [vmem:[#allocation8 + $0x10] sm:$0xf]
    %v941 = vld [vmem:[#allocation8 + $0x14] sm:$0xf]
    %v942 = vld [vmem:[#allocation8 + $0x18] sm:$0xf]
    %v943 = vld [vmem:[#allocation8 + $0x1c] sm:$0xf]
    %v944 = vld [vmem:[#allocation8 + $0x20] sm:$0xf]
    %v945 = vld [vmem:[#allocation8 + $0x24] sm:$0xf]
    %v946 = vld [vmem:[#allocation8 + $0x28] sm:$0xf]
    %v947 = vld [vmem:[#allocation8 + $0x2c] sm:$0xf]
    %v948 = vld [vmem:[#allocation8 + $0x30] sm:$0xf]
    %v949 = vld [vmem:[#allocation8 + $0x34] sm:$0xf]
    %v950 = vld [vmem:[#allocation8 + $0x38] sm:$0xf]
    %v951 = vld [vmem:[#allocation8 + $0x3c] sm:$0xf]
    %v953 = vlaneseq
    %v954 = vshrl.u32 %v953, 7
    %v955 = vsub.s32 0, %v954
    %v956 = vrot.slane %v193, %v955
    %v974 = vunpack.c.l.b16 %v936
    %v975 = vunpack.c.l.b16 %v937
    %v976 = vunpack.c.l.b16 %v938
    %v977 = vunpack.c.l.b16 %v939
    %v978 = vunpack.c.l.b16 %v940
    %v979 = vunpack.c.l.b16 %v941
    %v980 = vunpack.c.l.b16 %v942
    %v981 = vunpack.c.l.b16 %v943
    %v982 = vunpack.c.l.b16 %v944
    %v983 = vunpack.c.l.b16 %v945
    %v984 = vunpack.c.l.b16 %v946
    %v985 = vunpack.c.l.b16 %v947
    %v986 = vunpack.c.l.b16 %v948
    %v987 = vunpack.c.l.b16 %v949
    %v988 = vunpack.c.l.b16 %v950
    %v989 = vunpack.c.l.b16 %v951
    %v990 = vpack.c.b16 %v975, %v974
    %v991 = vpack.c.b16 %v977, %v976
    %v992 = vpack.c.b16 %v979, %v978
    %v993 = vpack.c.b16 %v981, %v980
    %v994 = vpack.c.b16 %v983, %v982
    %v995 = vpack.c.b16 %v985, %v984
    %v996 = vpack.c.b16 %v987, %v986
    %v997 = vpack.c.b16 %v989, %v988
    %1006 = vmatprep.subr.bf16.mxu0 0
    %1007 = vmatpush1.bf16.msra.mxu0 %v990
    %1008 = vmatprep.subr.bf16.mxu0 0
    %1009 = vmatpush1.bf16.msra.mxu0 %v991
    %1010 = vmatprep.subr.bf16.mxu0 0
    %1011 = vmatpush1.bf16.msra.mxu0 %v992
    %1012 = vmatprep.subr.bf16.mxu0 0
    %1013 = vmatpush1.bf16.msra.mxu0 %v993
    %1014 = vmatprep.subr.bf16.mxu0 0
    %1015 = vmatpush1.bf16.msra.mxu0 %v994
    %1016 = vmatprep.subr.bf16.mxu0 0
    %1017 = vmatpush1.bf16.msra.mxu0 %v995
    %1018 = vmatprep.subr.bf16.mxu0 0
    %1019 = vmatpush1.bf16.msra.mxu0 %v996
    %1020 = vmatprep.subr.bf16.mxu0 0
    %1021 = vmatpush1.bf16.msra.mxu0 %v997
    %1022 = vmatprep.subr.bf16.mxu0 0
    %1023 = vmatpush1.bf16.msra.mxu0 0
    %1024 = vmatprep.subr.bf16.mxu0 0
    %1025 = vmatpush1.bf16.msra.mxu0 0
    %1026 = vmatprep.subr.bf16.mxu0 0
    %1027 = vmatpush1.bf16.msra.mxu0 0
    %1028 = vmatprep.subr.bf16.mxu0 0
    %1029 = vmatpush1.bf16.msra.mxu0 0
    %1030 = vmatprep.subr.bf16.mxu0 0
    %1031 = vmatpush1.bf16.msra.mxu0 0
    %1032 = vmatprep.subr.bf16.mxu0 0
    %1033 = vmatpush1.bf16.msra.mxu0 0
    %1034 = vmatprep.subr.bf16.mxu0 0
    %1035 = vmatpush1.bf16.msra.mxu0 0
    %1036 = vmatprep.subr.bf16.mxu0 0
    %1037 = vmatpush1.bf16.msra.mxu0 0
    %1038 = vmatprep.mubr.bf16.mxu0 0
    %1039 = vmatmul.mubr.bf16.gmra.mrb[0].mxu0 %v920
    %v1040 = vpop.f32.mrb[0].mxu0
    %v1041 = vadd.f32 %v956, %v1040
    %v1042 = vpop.f32.mrb[0].mxu0
    %v1043 = vpop.f32.mrb[0].mxu0
    %v1044 = vadd.f32 %v956, %v1043
    %v1045 = vpop.f32.mrb[0].mxu0
    %1046 = vmatprep.mubr.bf16.mxu0 0
    %1047 = vmatmul.mubr.bf16.gmra.mrb[0].mxu0 %v921
    %v1048 = vpop.f32.mrb[0].mxu0
    %v1049 = vadd.f32 %v956, %v1048
    %v1050 = vpop.f32.mrb[0].mxu0
    %v1051 = vpop.f32.mrb[0].mxu0
    %v1052 = vadd.f32 %v956, %v1051
    %v1053 = vpop.f32.mrb[0].mxu0
    %1054 = vmatprep.mubr.bf16.mxu0 0
    %1055 = vmatmul.mubr.bf16.gmra.mrb[0].mxu0 %v922
    %v1056 = vpop.f32.mrb[0].mxu0
    %v1057 = vadd.f32 %v956, %v1056
    %v1058 = vpop.f32.mrb[0].mxu0
    %v1059 = vpop.f32.mrb[0].mxu0
    %v1060 = vadd.f32 %v956, %v1059
    %v1061 = vpop.f32.mrb[0].mxu0
    %1062 = vmatprep.mubr.bf16.mxu0 0
    %1063 = vmatmul.mubr.bf16.gmra.mrb[0].mxu0 %v923
    %v1064 = vpop.f32.mrb[0].mxu0
    %v1065 = vadd.f32 %v956, %v1064
    %v1066 = vpop.f32.mrb[0].mxu0
    %v1067 = vpop.f32.mrb[0].mxu0
    %v1068 = vadd.f32 %v956, %v1067
    %v1069 = vpop.f32.mrb[0].mxu0
    %1070 = vmatprep.mubr.bf16.mxu0 0
    %1071 = vmatmul.mubr.bf16.gmra.mrb[0].mxu0 %v924
    %v1072 = vpop.f32.mrb[0].mxu0
    %v1073 = vadd.f32 %v956, %v1072
    %v1074 = vpop.f32.mrb[0].mxu0
    %v1075 = vpop.f32.mrb[0].mxu0
    %v1076 = vadd.f32 %v956, %v1075
    %v1077 = vpop.f32.mrb[0].mxu0
    %1078 = vmatprep.mubr.bf16.mxu0 0
    %1079 = vmatmul.mubr.bf16.gmra.mrb[0].mxu0 %v925
    %v1080 = vpop.f32.mrb[0].mxu0
    %v1081 = vadd.f32 %v956, %v1080
    %v1082 = vpop.f32.mrb[0].mxu0
    %v1083 = vpop.f32.mrb[0].mxu0
    %v1084 = vadd.f32 %v956, %v1083
    %v1085 = vpop.f32.mrb[0].mxu0
    %1086 = vmatprep.mubr.bf16.mxu0 0
    %1087 = vmatmul.mubr.bf16.gmra.mrb[0].mxu0 %v926
    %v1088 = vpop.f32.mrb[0].mxu0
    %v1089 = vadd.f32 %v956, %v1088
    %v1090 = vpop.f32.mrb[0].mxu0
    %v1091 = vpop.f32.mrb[0].mxu0
    %v1092 = vadd.f32 %v956, %v1091
    %v1093 = vpop.f32.mrb[0].mxu0
    %1094 = vmatprep.mubr.bf16.mxu0 0
    %1095 = vmatmul.mubr.bf16.gmra.mrb[0].mxu0 %v927
    %v1096 = vpop.f32.mrb[0].mxu0
    %v1097 = vadd.f32 %v956, %v1096
    %v1098 = vpop.f32.mrb[0].mxu0
    %v1099 = vpop.f32.mrb[0].mxu0
    %v1100 = vadd.f32 %v956, %v1099
    %v1101 = vpop.f32.mrb[0].mxu0
    %1102 = vmatprep.mubr.bf16.mxu0 0
    %1103 = vmatmul.mubr.bf16.gmra.mrb[0].mxu0 %v928
    %v1104 = vpop.f32.mrb[0].mxu0
    %v1105 = vadd.f32 %v956, %v1104
    %v1106 = vpop.f32.mrb[0].mxu0
    %v1107 = vpop.f32.mrb[0].mxu0
    %v1108 = vadd.f32 %v956, %v1107
    %v1109 = vpop.f32.mrb[0].mxu0
    %1110 = vmatprep.mubr.bf16.mxu0 0
    %1111 = vmatmul.mubr.bf16.gmra.mrb[0].mxu0 %v929
    %v1112 = vpop.f32.mrb[0].mxu0
    %v1113 = vadd.f32 %v956, %v1112
    %v1114 = vpop.f32.mrb[0].mxu0
    %v1115 = vpop.f32.mrb[0].mxu0
    %v1116 = vadd.f32 %v956, %v1115
    %v1117 = vpop.f32.mrb[0].mxu0
    %1118 = vmatprep.mubr.bf16.mxu0 0
    %1119 = vmatmul.mubr.bf16.gmra.mrb[0].mxu0 %v930
    %v1120 = vpop.f32.mrb[0].mxu0
    %v1121 = vadd.f32 %v956, %v1120
    %v1122 = vpop.f32.mrb[0].mxu0
    %v1123 = vpop.f32.mrb[0].mxu0
    %v1124 = vadd.f32 %v956, %v1123
    %v1125 = vpop.f32.mrb[0].mxu0
    %1126 = vmatprep.mubr.bf16.mxu0 0
    %1127 = vmatmul.mubr.bf16.gmra.mrb[0].mxu0 %v931
    %v1128 = vpop.f32.mrb[0].mxu0
    %v1129 = vadd.f32 %v956, %v1128
    %v1130 = vpop.f32.mrb[0].mxu0
    %v1131 = vpop.f32.mrb[0].mxu0
    %v1132 = vadd.f32 %v956, %v1131
    %v1133 = vpop.f32.mrb[0].mxu0
    %1134 = vmatprep.mubr.bf16.mxu0 0
    %1135 = vmatmul.mubr.bf16.gmra.mrb[0].mxu0 %v932
    %v1136 = vpop.f32.mrb[0].mxu0
    %v1137 = vadd.f32 %v956, %v1136
    %v1138 = vpop.f32.mrb[0].mxu0
    %v1139 = vpop.f32.mrb[0].mxu0
    %v1140 = vadd.f32 %v956, %v1139
    %v1141 = vpop.f32.mrb[0].mxu0
    %1142 = vmatprep.mubr.bf16.mxu0 0
    %1143 = vmatmul.mubr.bf16.gmra.mrb[0].mxu0 %v933
    %v1144 = vpop.f32.mrb[0].mxu0
    %v1145 = vadd.f32 %v956, %v1144
    %v1146 = vpop.f32.mrb[0].mxu0
    %v1147 = vpop.f32.mrb[0].mxu0
    %v1148 = vadd.f32 %v956, %v1147
    %v1149 = vpop.f32.mrb[0].mxu0
    %1150 = vmatprep.mubr.bf16.mxu0 0
    %1151 = vmatmul.mubr.bf16.gmra.mrb[0].mxu0 %v934
    %v1152 = vpop.f32.mrb[0].mxu0
    %v1153 = vadd.f32 %v956, %v1152
    %v1154 = vpop.f32.mrb[0].mxu0
    %v1155 = vpop.f32.mrb[0].mxu0
    %v1156 = vadd.f32 %v956, %v1155
    %v1157 = vpop.f32.mrb[0].mxu0
    %1158 = vmatprep.mubr.bf16.mxu0 0
    %1159 = vmatmul.mubr.bf16.gmra.mrb[0].mxu0 %v935
    %v1160 = vpop.f32.mrb[0].mxu0
    %v1161 = vadd.f32 %v956, %v1160
    %v1162 = vpop.f32.mrb[0].mxu0
    %v1163 = vpop.f32.mrb[0].mxu0
    %v1164 = vadd.f32 %v956, %v1163
    %v1165 = vpop.f32.mrb[0].mxu0
    %1166 = vdwg.mxu0
    %1167 = vst [vmem:[%s13] sm:$0xff] %v1041
    %1168 = vst [vmem:[%s13 + $0x8] sm:$0xff] %v1044
    %1169 = vst [vmem:[%s13 + $0x10] sm:$0xff] %v1049
    %1170 = vst [vmem:[%s13 + $0x18] sm:$0xff] %v1052
    %1171 = vst [vmem:[%s13 + $0x20] sm:$0xff] %v1057
    %1172 = vst [vmem:[%s13 + $0x28] sm:$0xff] %v1060
    %1173 = vst [vmem:[%s13 + $0x30] sm:$0xff] %v1065
    %1174 = vst [vmem:[%s13 + $0x38] sm:$0xff] %v1068
    %1175 = vst [vmem:[%s13 + $0x40] sm:$0xff] %v1073
    %1176 = vst [vmem:[%s13 + $0x48] sm:$0xff] %v1076
    %1177 = vst [vmem:[%s13 + $0x50] sm:$0xff] %v1081
    %1178 = vst [vmem:[%s13 + $0x58] sm:$0xff] %v1084
    %1179 = vst [vmem:[%s13 + $0x60] sm:$0xff] %v1089
    %1180 = vst [vmem:[%s13 + $0x68] sm:$0xff] %v1092
    %1181 = vst [vmem:[%s13 + $0x70] sm:$0xff] %v1097
    %1182 = vst [vmem:[%s13 + $0x78] sm:$0xff] %v1100
    %1183 = vst [vmem:[%s13 + $0x80] sm:$0xff] %v1105
    %1184 = vst [vmem:[%s13 + $0x88] sm:$0xff] %v1108
    %1185 = vst [vmem:[%s13 + $0x90] sm:$0xff] %v1113
    %1186 = vst [vmem:[%s13 + $0x98] sm:$0xff] %v1116
    %1187 = vst [vmem:[%s13 + $0xa0] sm:$0xff] %v1121
    %1188 = vst [vmem:[%s13 + $0xa8] sm:$0xff] %v1124
    %1189 = vst [vmem:[%s13 + $0xb0] sm:$0xff] %v1129
    %1190 = vst [vmem:[%s13 + $0xb8] sm:$0xff] %v1132
    %1191 = vst [vmem:[%s13 + $0xc0] sm:$0xff] %v1137
    %1192 = vst [vmem:[%s13 + $0xc8] sm:$0xff] %v1140
    %1193 = vst [vmem:[%s13 + $0xd0] sm:$0xff] %v1145
    %1194 = vst [vmem:[%s13 + $0xd8] sm:$0xff] %v1148
    %1195 = vst [vmem:[%s13 + $0xe0] sm:$0xff] %v1153
    %1196 = vst [vmem:[%s13 + $0xe8] sm:$0xff] %v1156
    %1197 = vst [vmem:[%s13 + $0xf0] sm:$0xff] %v1161
    %1198 = vst [vmem:[%s13 + $0xf8] sm:$0xff] %v1164
    %v1199 = vpack.c.bf16 %v1044, %v1041
    %v1200 = vpack.c.bf16 %v1052, %v1049
    %v1201 = vpack.c.bf16 %v1060, %v1057
    %v1202 = vpack.c.bf16 %v1068, %v1065
    %v1203 = vpack.c.bf16 %v1076, %v1073
    %v1204 = vpack.c.bf16 %v1084, %v1081
    %v1205 = vpack.c.bf16 %v1092, %v1089
    %v1206 = vpack.c.bf16 %v1100, %v1097
    %v1207 = vpack.c.bf16 %v1108, %v1105
    %v1208 = vpack.c.bf16 %v1116, %v1113
    %v1209 = vpack.c.bf16 %v1124, %v1121
    %v1210 = vpack.c.bf16 %v1132, %v1129
    %v1211 = vpack.c.bf16 %v1140, %v1137
    %v1212 = vpack.c.bf16 %v1148, %v1145
    %v1213 = vpack.c.bf16 %v1156, %v1153
    %v1214 = vpack.c.bf16 %v1164, %v1161
    %v1215 = vld [vmem:[#allocation10] sm:$0xf]
    %v1216 = vld [vmem:[#allocation10 + $0x4] sm:$0xf]
    %v1217 = vld [vmem:[#allocation10 + $0x8] sm:$0xf]
    %v1218 = vld [vmem:[#allocation10 + $0xc] sm:$0xf]
    %v1219 = vld [vmem:[#allocation10 + $0x10] sm:$0xf]
    %v1220 = vld [vmem:[#allocation10 + $0x14] sm:$0xf]
    %v1221 = vld [vmem:[#allocation10 + $0x18] sm:$0xf]
    %v1222 = vld [vmem:[#allocation10 + $0x1c] sm:$0xf]
    %v1223 = vld [vmem:[#allocation10 + $0x20] sm:$0xf]
    %v1224 = vld [vmem:[#allocation10 + $0x24] sm:$0xf]
    %v1225 = vld [vmem:[#allocation10 + $0x28] sm:$0xf]
    %v1226 = vld [vmem:[#allocation10 + $0x2c] sm:$0xf]
    %v1227 = vld [vmem:[#allocation10 + $0x30] sm:$0xf]
    %v1228 = vld [vmem:[#allocation10 + $0x34] sm:$0xf]
    %v1229 = vld [vmem:[#allocation10 + $0x38] sm:$0xf]
    %v1230 = vld [vmem:[#allocation10 + $0x3c] sm:$0xf]
    %v1232 = vlaneseq
    %v1233 = vshrl.u32 %v1232, 7
    %v1234 = vsub.s32 0, %v1233
    %v1235 = vrot.slane %v194, %v1234
    %v1253 = vunpack.c.l.b16 %v1215
    %v1254 = vunpack.c.l.b16 %v1216
    %v1255 = vunpack.c.l.b16 %v1217
    %v1256 = vunpack.c.l.b16 %v1218
    %v1257 = vunpack.c.l.b16 %v1219
    %v1258 = vunpack.c.l.b16 %v1220
    %v1259 = vunpack.c.l.b16 %v1221
    %v1260 = vunpack.c.l.b16 %v1222
    %v1261 = vunpack.c.l.b16 %v1223
    %v1262 = vunpack.c.l.b16 %v1224
    %v1263 = vunpack.c.l.b16 %v1225
    %v1264 = vunpack.c.l.b16 %v1226
    %v1265 = vunpack.c.l.b16 %v1227
    %v1266 = vunpack.c.l.b16 %v1228
    %v1267 = vunpack.c.l.b16 %v1229
    %v1268 = vunpack.c.l.b16 %v1230
    %v1269 = vpack.c.b16 %v1254, %v1253
    %v1270 = vpack.c.b16 %v1256, %v1255
    %v1271 = vpack.c.b16 %v1258, %v1257
    %v1272 = vpack.c.b16 %v1260, %v1259
    %v1273 = vpack.c.b16 %v1262, %v1261
    %v1274 = vpack.c.b16 %v1264, %v1263
    %v1275 = vpack.c.b16 %v1266, %v1265
    %v1276 = vpack.c.b16 %v1268, %v1267
    %1285 = vmatprep.subr.bf16.mxu0 0
    %1286 = vmatpush1.bf16.msra.mxu0 %v1269
    %1287 = vmatprep.subr.bf16.mxu0 0
    %1288 = vmatpush1.bf16.msra.mxu0 %v1270
    %1289 = vmatprep.subr.bf16.mxu0 0
    %1290 = vmatpush1.bf16.msra.mxu0 %v1271
    %1291 = vmatprep.subr.bf16.mxu0 0
    %1292 = vmatpush1.bf16.msra.mxu0 %v1272
    %1293 = vmatprep.subr.bf16.mxu0 0
    %1294 = vmatpush1.bf16.msra.mxu0 %v1273
    %1295 = vmatprep.subr.bf16.mxu0 0
    %1296 = vmatpush1.bf16.msra.mxu0 %v1274
    %1297 = vmatprep.subr.bf16.mxu0 0
    %1298 = vmatpush1.bf16.msra.mxu0 %v1275
    %1299 = vmatprep.subr.bf16.mxu0 0
    %1300 = vmatpush1.bf16.msra.mxu0 %v1276
    %1301 = vmatprep.subr.bf16.mxu0 0
    %1302 = vmatpush1.bf16.msra.mxu0 0
    %1303 = vmatprep.subr.bf16.mxu0 0
    %1304 = vmatpush1.bf16.msra.mxu0 0
    %1305 = vmatprep.subr.bf16.mxu0 0
    %1306 = vmatpush1.bf16.msra.mxu0 0
    %1307 = vmatprep.subr.bf16.mxu0 0
    %1308 = vmatpush1.bf16.msra.mxu0 0
    %1309 = vmatprep.subr.bf16.mxu0 0
    %1310 = vmatpush1.bf16.msra.mxu0 0
    %1311 = vmatprep.subr.bf16.mxu0 0
    %1312 = vmatpush1.bf16.msra.mxu0 0
    %1313 = vmatprep.subr.bf16.mxu0 0
    %1314 = vmatpush1.bf16.msra.mxu0 0
    %1315 = vmatprep.subr.bf16.mxu0 0
    %1316 = vmatpush1.bf16.msra.mxu0 0
    %1317 = vmatprep.mubr.bf16.mxu0 0
    %1318 = vmatmul.mubr.bf16.gmra.mrb[0].mxu0 %v1199
    %v1319 = vpop.f32.mrb[0].mxu0
    %v1320 = vadd.f32 %v1235, %v1319
    %v1321 = vpop.f32.mrb[0].mxu0
    %v1322 = vpop.f32.mrb[0].mxu0
    %v1323 = vadd.f32 %v1235, %v1322
    %v1324 = vpop.f32.mrb[0].mxu0
    %1325 = vmatprep.mubr.bf16.mxu0 0
    %1326 = vmatmul.mubr.bf16.gmra.mrb[0].mxu0 %v1200
    %v1327 = vpop.f32.mrb[0].mxu0
    %v1328 = vadd.f32 %v1235, %v1327
    %v1329 = vpop.f32.mrb[0].mxu0
    %v1330 = vpop.f32.mrb[0].mxu0
    %v1331 = vadd.f32 %v1235, %v1330
    %v1332 = vpop.f32.mrb[0].mxu0
    %1333 = vmatprep.mubr.bf16.mxu0 0
    %1334 = vmatmul.mubr.bf16.gmra.mrb[0].mxu0 %v1201
    %v1335 = vpop.f32.mrb[0].mxu0
    %v1336 = vadd.f32 %v1235, %v1335
    %v1337 = vpop.f32.mrb[0].mxu0
    %v1338 = vpop.f32.mrb[0].mxu0
    %v1339 = vadd.f32 %v1235, %v1338
    %v1340 = vpop.f32.mrb[0].mxu0
    %1341 = vmatprep.mubr.bf16.mxu0 0
    %1342 = vmatmul.mubr.bf16.gmra.mrb[0].mxu0 %v1202
    %v1343 = vpop.f32.mrb[0].mxu0
    %v1344 = vadd.f32 %v1235, %v1343
    %v1345 = vpop.f32.mrb[0].mxu0
    %v1346 = vpop.f32.mrb[0].mxu0
    %v1347 = vadd.f32 %v1235, %v1346
    %v1348 = vpop.f32.mrb[0].mxu0
    %1349 = vmatprep.mubr.bf16.mxu0 0
    %1350 = vmatmul.mubr.bf16.gmra.mrb[0].mxu0 %v1203
    %v1351 = vpop.f32.mrb[0].mxu0
    %v1352 = vadd.f32 %v1235, %v1351
    %v1353 = vpop.f32.mrb[0].mxu0
    %v1354 = vpop.f32.mrb[0].mxu0
    %v1355 = vadd.f32 %v1235, %v1354
    %v1356 = vpop.f32.mrb[0].mxu0
    %1357 = vmatprep.mubr.bf16.mxu0 0
    %1358 = vmatmul.mubr.bf16.gmra.mrb[0].mxu0 %v1204
    %v1359 = vpop.f32.mrb[0].mxu0
    %v1360 = vadd.f32 %v1235, %v1359
    %v1361 = vpop.f32.mrb[0].mxu0
    %v1362 = vpop.f32.mrb[0].mxu0
    %v1363 = vadd.f32 %v1235, %v1362
    %v1364 = vpop.f32.mrb[0].mxu0
    %1365 = vmatprep.mubr.bf16.mxu0 0
    %1366 = vmatmul.mubr.bf16.gmra.mrb[0].mxu0 %v1205
    %v1367 = vpop.f32.mrb[0].mxu0
    %v1368 = vadd.f32 %v1235, %v1367
    %v1369 = vpop.f32.mrb[0].mxu0
    %v1370 = vpop.f32.mrb[0].mxu0
    %v1371 = vadd.f32 %v1235, %v1370
    %v1372 = vpop.f32.mrb[0].mxu0
    %1373 = vmatprep.mubr.bf16.mxu0 0
    %1374 = vmatmul.mubr.bf16.gmra.mrb[0].mxu0 %v1206
    %v1375 = vpop.f32.mrb[0].mxu0
    %v1376 = vadd.f32 %v1235, %v1375
    %v1377 = vpop.f32.mrb[0].mxu0
    %v1378 = vpop.f32.mrb[0].mxu0
    %v1379 = vadd.f32 %v1235, %v1378
    %v1380 = vpop.f32.mrb[0].mxu0
    %1381 = vmatprep.mubr.bf16.mxu0 0
    %1382 = vmatmul.mubr.bf16.gmra.mrb[0].mxu0 %v1207
    %v1383 = vpop.f32.mrb[0].mxu0
    %v1384 = vadd.f32 %v1235, %v1383
    %v1385 = vpop.f32.mrb[0].mxu0
    %v1386 = vpop.f32.mrb[0].mxu0
    %v1387 = vadd.f32 %v1235, %v1386
    %v1388 = vpop.f32.mrb[0].mxu0
    %1389 = vmatprep.mubr.bf16.mxu0 0
    %1390 = vmatmul.mubr.bf16.gmra.mrb[0].mxu0 %v1208
    %v1391 = vpop.f32.mrb[0].mxu0
    %v1392 = vadd.f32 %v1235, %v1391
    %v1393 = vpop.f32.mrb[0].mxu0
    %v1394 = vpop.f32.mrb[0].mxu0
    %v1395 = vadd.f32 %v1235, %v1394
    %v1396 = vpop.f32.mrb[0].mxu0
    %1397 = vmatprep.mubr.bf16.mxu0 0
    %1398 = vmatmul.mubr.bf16.gmra.mrb[0].mxu0 %v1209
    %v1399 = vpop.f32.mrb[0].mxu0
    %v1400 = vadd.f32 %v1235, %v1399
    %v1401 = vpop.f32.mrb[0].mxu0
    %v1402 = vpop.f32.mrb[0].mxu0
    %v1403 = vadd.f32 %v1235, %v1402
    %v1404 = vpop.f32.mrb[0].mxu0
    %1405 = vmatprep.mubr.bf16.mxu0 0
    %1406 = vmatmul.mubr.bf16.gmra.mrb[0].mxu0 %v1210
    %v1407 = vpop.f32.mrb[0].mxu0
    %v1408 = vadd.f32 %v1235, %v1407
    %v1409 = vpop.f32.mrb[0].mxu0
    %v1410 = vpop.f32.mrb[0].mxu0
    %v1411 = vadd.f32 %v1235, %v1410
    %v1412 = vpop.f32.mrb[0].mxu0
    %1413 = vmatprep.mubr.bf16.mxu0 0
    %1414 = vmatmul.mubr.bf16.gmra.mrb[0].mxu0 %v1211
    %v1415 = vpop.f32.mrb[0].mxu0
    %v1416 = vadd.f32 %v1235, %v1415
    %v1417 = vpop.f32.mrb[0].mxu0
    %v1418 = vpop.f32.mrb[0].mxu0
    %v1419 = vadd.f32 %v1235, %v1418
    %v1420 = vpop.f32.mrb[0].mxu0
    %1421 = vmatprep.mubr.bf16.mxu0 0
    %1422 = vmatmul.mubr.bf16.gmra.mrb[0].mxu0 %v1212
    %v1423 = vpop.f32.mrb[0].mxu0
    %v1424 = vadd.f32 %v1235, %v1423
    %v1425 = vpop.f32.mrb[0].mxu0
    %v1426 = vpop.f32.mrb[0].mxu0
    %v1427 = vadd.f32 %v1235, %v1426
    %v1428 = vpop.f32.mrb[0].mxu0
    %1429 = vmatprep.mubr.bf16.mxu0 0
    %1430 = vmatmul.mubr.bf16.gmra.mrb[0].mxu0 %v1213
    %v1431 = vpop.f32.mrb[0].mxu0
    %v1432 = vadd.f32 %v1235, %v1431
    %v1433 = vpop.f32.mrb[0].mxu0
    %v1434 = vpop.f32.mrb[0].mxu0
    %v1435 = vadd.f32 %v1235, %v1434
    %v1436 = vpop.f32.mrb[0].mxu0
    %1437 = vmatprep.mubr.bf16.mxu0 0
    %1438 = vmatmul.mubr.bf16.gmra.mrb[0].mxu0 %v1214
    %v1439 = vpop.f32.mrb[0].mxu0
    %v1440 = vadd.f32 %v1235, %v1439
    %v1441 = vpop.f32.mrb[0].mxu0
    %v1442 = vpop.f32.mrb[0].mxu0
    %v1443 = vadd.f32 %v1235, %v1442
    %v1444 = vpop.f32.mrb[0].mxu0
    %1445 = vdwg.mxu0
    %v1446 = vmax.f32 %v1320, 0.0
    %v1447 = vmax.f32 %v1323, 0.0
    %v1448 = vmax.f32 %v1328, 0.0
    %v1449 = vmax.f32 %v1331, 0.0
    %v1450 = vmax.f32 %v1336, 0.0
    %v1451 = vmax.f32 %v1339, 0.0
    %v1452 = vmax.f32 %v1344, 0.0
    %v1453 = vmax.f32 %v1347, 0.0
    %v1454 = vmax.f32 %v1352, 0.0
    %v1455 = vmax.f32 %v1355, 0.0
    %v1456 = vmax.f32 %v1360, 0.0
    %v1457 = vmax.f32 %v1363, 0.0
    %v1458 = vmax.f32 %v1368, 0.0
    %v1459 = vmax.f32 %v1371, 0.0
    %v1460 = vmax.f32 %v1376, 0.0
    %v1461 = vmax.f32 %v1379, 0.0
    %v1462 = vmax.f32 %v1384, 0.0
    %v1463 = vmax.f32 %v1387, 0.0
    %v1464 = vmax.f32 %v1392, 0.0
    %v1465 = vmax.f32 %v1395, 0.0
    %v1466 = vmax.f32 %v1400, 0.0
    %v1467 = vmax.f32 %v1403, 0.0
    %v1468 = vmax.f32 %v1408, 0.0
    %v1469 = vmax.f32 %v1411, 0.0
    %v1470 = vmax.f32 %v1416, 0.0
    %v1471 = vmax.f32 %v1419, 0.0
    %v1472 = vmax.f32 %v1424, 0.0
    %v1473 = vmax.f32 %v1427, 0.0
    %v1474 = vmax.f32 %v1432, 0.0
    %v1475 = vmax.f32 %v1435, 0.0
    %v1476 = vmax.f32 %v1440, 0.0
    %v1477 = vmax.f32 %v1443, 0.0
    %v1478 = vpack.c.bf16 %v1447, %v1446
    %v1479 = vpack.c.bf16 %v1449, %v1448
    %v1480 = vpack.c.bf16 %v1451, %v1450
    %v1481 = vpack.c.bf16 %v1453, %v1452
    %v1482 = vpack.c.bf16 %v1455, %v1454
    %v1483 = vpack.c.bf16 %v1457, %v1456
    %v1484 = vpack.c.bf16 %v1459, %v1458
    %v1485 = vpack.c.bf16 %v1461, %v1460
    %v1486 = vpack.c.bf16 %v1463, %v1462
    %v1487 = vpack.c.bf16 %v1465, %v1464
    %v1488 = vpack.c.bf16 %v1467, %v1466
    %v1489 = vpack.c.bf16 %v1469, %v1468
    %v1490 = vpack.c.bf16 %v1471, %v1470
    %v1491 = vpack.c.bf16 %v1473, %v1472
    %v1492 = vpack.c.bf16 %v1475, %v1474
    %v1493 = vpack.c.bf16 %v1477, %v1476
    %v1494 = vld [vmem:[#allocation11] sm:$0xff]
    %v1495 = vld [vmem:[#allocation11 + $0x8] sm:$0xff]
    %v1496 = vld [vmem:[#allocation11 + $0x10] sm:$0xff]
    %v1497 = vld [vmem:[#allocation11 + $0x18] sm:$0xff]
    %v1498 = vld [vmem:[#allocation11 + $0x20] sm:$0xff]
    %v1499 = vld [vmem:[#allocation11 + $0x28] sm:$0xff]
    %v1500 = vld [vmem:[#allocation11 + $0x30] sm:$0xff]
    %v1501 = vld [vmem:[#allocation11 + $0x38] sm:$0xff]
    %v1502 = vld [vmem:[#allocation11 + $0x40] sm:$0xff]
    %v1503 = vld [vmem:[#allocation11 + $0x48] sm:$0xff]
    %v1504 = vld [vmem:[#allocation11 + $0x50] sm:$0xff]
    %v1505 = vld [vmem:[#allocation11 + $0x58] sm:$0xff]
    %v1506 = vld [vmem:[#allocation11 + $0x60] sm:$0xff]
    %v1507 = vld [vmem:[#allocation11 + $0x68] sm:$0xff]
    %v1508 = vld [vmem:[#allocation11 + $0x70] sm:$0xff]
    %v1509 = vld [vmem:[#allocation11 + $0x78] sm:$0xff]
    %v1511 = vlaneseq
    %v1512 = vshrl.u32 %v1511, 7
    %v1513 = vsub.s32 0, %v1512
    %v1514 = vrot.slane %v195, %v1513
    %v1515 = vlaneseq
    %v1516 = vshrl.u32 %v1515, 7
    %v1517 = vsub.s32 1, %v1516
    %v1518 = vrot.slane %v195, %v1517
    %v1537 = vunpack.c.l.b16 %v1494
    %v1538 = vunpack.c.h.b16 %v1494
    %v1539 = vunpack.c.l.b16 %v1495
    %v1540 = vunpack.c.h.b16 %v1495
    %v1541 = vunpack.c.l.b16 %v1496
    %v1542 = vunpack.c.h.b16 %v1496
    %v1543 = vunpack.c.l.b16 %v1497
    %v1544 = vunpack.c.h.b16 %v1497
    %v1545 = vunpack.c.l.b16 %v1498
    %v1546 = vunpack.c.h.b16 %v1498
    %v1547 = vunpack.c.l.b16 %v1499
    %v1548 = vunpack.c.h.b16 %v1499
    %v1549 = vunpack.c.l.b16 %v1500
    %v1550 = vunpack.c.h.b16 %v1500
    %v1551 = vunpack.c.l.b16 %v1501
    %v1552 = vunpack.c.h.b16 %v1501
    %v1553 = vunpack.c.l.b16 %v1502
    %v1554 = vunpack.c.h.b16 %v1502
    %v1555 = vunpack.c.l.b16 %v1503
    %v1556 = vunpack.c.h.b16 %v1503
    %v1557 = vunpack.c.l.b16 %v1504
    %v1558 = vunpack.c.h.b16 %v1504
    %v1559 = vunpack.c.l.b16 %v1505
    %v1560 = vunpack.c.h.b16 %v1505
    %v1561 = vunpack.c.l.b16 %v1506
    %v1562 = vunpack.c.h.b16 %v1506
    %v1563 = vunpack.c.l.b16 %v1507
    %v1564 = vunpack.c.h.b16 %v1507
    %v1565 = vunpack.c.l.b16 %v1508
    %v1566 = vunpack.c.h.b16 %v1508
    %v1567 = vunpack.c.l.b16 %v1509
    %v1568 = vunpack.c.h.b16 %v1509
    %v1569 = vpack.c.b16 %v1539, %v1537
    %v1570 = vpack.c.b16 %v1540, %v1538
    %v1571 = vpack.c.b16 %v1543, %v1541
    %v1572 = vpack.c.b16 %v1544, %v1542
    %v1573 = vpack.c.b16 %v1547, %v1545
    %v1574 = vpack.c.b16 %v1548, %v1546
    %v1575 = vpack.c.b16 %v1551, %v1549
    %v1576 = vpack.c.b16 %v1552, %v1550
    %v1577 = vpack.c.b16 %v1555, %v1553
    %v1578 = vpack.c.b16 %v1556, %v1554
    %v1579 = vpack.c.b16 %v1559, %v1557
    %v1580 = vpack.c.b16 %v1560, %v1558
    %v1581 = vpack.c.b16 %v1563, %v1561
    %v1582 = vpack.c.b16 %v1564, %v1562
    %v1583 = vpack.c.b16 %v1567, %v1565
    %v1584 = vpack.c.b16 %v1568, %v1566
    %1601 = vmatprep.subr.bf16.mxu0 %v1570
    %1602 = vmatpush1.bf16.msra.mxu0 %v1569
    %1603 = vmatprep.subr.bf16.mxu0 %v1572
    %1604 = vmatpush1.bf16.msra.mxu0 %v1571
    %1605 = vmatprep.subr.bf16.mxu0 %v1574
    %1606 = vmatpush1.bf16.msra.mxu0 %v1573
    %1607 = vmatprep.subr.bf16.mxu0 %v1576
    %1608 = vmatpush1.bf16.msra.mxu0 %v1575
    %1609 = vmatprep.subr.bf16.mxu0 %v1578
    %1610 = vmatpush1.bf16.msra.mxu0 %v1577
    %1611 = vmatprep.subr.bf16.mxu0 %v1580
    %1612 = vmatpush1.bf16.msra.mxu0 %v1579
    %1613 = vmatprep.subr.bf16.mxu0 %v1582
    %1614 = vmatpush1.bf16.msra.mxu0 %v1581
    %1615 = vmatprep.subr.bf16.mxu0 %v1584
    %1616 = vmatpush1.bf16.msra.mxu0 %v1583
    %1617 = vmatprep.subr.bf16.mxu0 0
    %1618 = vmatpush1.bf16.msra.mxu0 0
    %1619 = vmatprep.subr.bf16.mxu0 0
    %1620 = vmatpush1.bf16.msra.mxu0 0
    %1621 = vmatprep.subr.bf16.mxu0 0
    %1622 = vmatpush1.bf16.msra.mxu0 0
    %1623 = vmatprep.subr.bf16.mxu0 0
    %1624 = vmatpush1.bf16.msra.mxu0 0
    %1625 = vmatprep.subr.bf16.mxu0 0
    %1626 = vmatpush1.bf16.msra.mxu0 0
    %1627 = vmatprep.subr.bf16.mxu0 0
    %1628 = vmatpush1.bf16.msra.mxu0 0
    %1629 = vmatprep.subr.bf16.mxu0 0
    %1630 = vmatpush1.bf16.msra.mxu0 0
    %1631 = vmatprep.subr.bf16.mxu0 0
    %1632 = vmatpush1.bf16.msra.mxu0 0
    %1633 = vmatprep.mubr.bf16.mxu0 0
    %1634 = vmatmul.mubr.bf16.gmra.mrb[0].mxu0 %v1478
    %v1635 = vpop.f32.mrb[0].mxu0
    %v1636 = vadd.f32 %v1514, %v1635
    %v1637 = vpop.f32.mrb[0].mxu0
    %v1638 = vadd.f32 %v1518, %v1637
    %v1639 = vpop.f32.mrb[0].mxu0
    %v1640 = vadd.f32 %v1514, %v1639
    %v1641 = vpop.f32.mrb[0].mxu0
    %v1642 = vadd.f32 %v1518, %v1641
    %1643 = vmatprep.mubr.bf16.mxu0 0
    %1644 = vmatmul.mubr.bf16.gmra.mrb[0].mxu0 %v1479
    %v1645 = vpop.f32.mrb[0].mxu0
    %v1646 = vadd.f32 %v1514, %v1645
    %v1647 = vpop.f32.mrb[0].mxu0
    %v1648 = vadd.f32 %v1518, %v1647
    %v1649 = vpop.f32.mrb[0].mxu0
    %v1650 = vadd.f32 %v1514, %v1649
    %v1651 = vpop.f32.mrb[0].mxu0
    %v1652 = vadd.f32 %v1518, %v1651
    %1653 = vmatprep.mubr.bf16.mxu0 0
    %1654 = vmatmul.mubr.bf16.gmra.mrb[0].mxu0 %v1480
    %v1655 = vpop.f32.mrb[0].mxu0
    %v1656 = vadd.f32 %v1514, %v1655
    %v1657 = vpop.f32.mrb[0].mxu0
    %v1658 = vadd.f32 %v1518, %v1657
    %v1659 = vpop.f32.mrb[0].mxu0
    %v1660 = vadd.f32 %v1514, %v1659
    %v1661 = vpop.f32.mrb[0].mxu0
    %v1662 = vadd.f32 %v1518, %v1661
    %1663 = vmatprep.mubr.bf16.mxu0 0
    %1664 = vmatmul.mubr.bf16.gmra.mrb[0].mxu0 %v1481
    %v1665 = vpop.f32.mrb[0].mxu0
    %v1666 = vadd.f32 %v1514, %v1665
    %v1667 = vpop.f32.mrb[0].mxu0
    %v1668 = vadd.f32 %v1518, %v1667
    %v1669 = vpop.f32.mrb[0].mxu0
    %v1670 = vadd.f32 %v1514, %v1669
    %v1671 = vpop.f32.mrb[0].mxu0
    %v1672 = vadd.f32 %v1518, %v1671
    %1673 = vmatprep.mubr.bf16.mxu0 0
    %1674 = vmatmul.mubr.bf16.gmra.mrb[0].mxu0 %v1482
    %v1675 = vpop.f32.mrb[0].mxu0
    %v1676 = vadd.f32 %v1514, %v1675
    %v1677 = vpop.f32.mrb[0].mxu0
    %v1678 = vadd.f32 %v1518, %v1677
    %v1679 = vpop.f32.mrb[0].mxu0
    %v1680 = vadd.f32 %v1514, %v1679
    %v1681 = vpop.f32.mrb[0].mxu0
    %v1682 = vadd.f32 %v1518, %v1681
    %1683 = vmatprep.mubr.bf16.mxu0 0
    %1684 = vmatmul.mubr.bf16.gmra.mrb[0].mxu0 %v1483
    %v1685 = vpop.f32.mrb[0].mxu0
    %v1686 = vadd.f32 %v1514, %v1685
    %v1687 = vpop.f32.mrb[0].mxu0
    %v1688 = vadd.f32 %v1518, %v1687
    %v1689 = vpop.f32.mrb[0].mxu0
    %v1690 = vadd.f32 %v1514, %v1689
    %v1691 = vpop.f32.mrb[0].mxu0
    %v1692 = vadd.f32 %v1518, %v1691
    %1693 = vmatprep.mubr.bf16.mxu0 0
    %1694 = vmatmul.mubr.bf16.gmra.mrb[0].mxu0 %v1484
    %v1695 = vpop.f32.mrb[0].mxu0
    %v1696 = vadd.f32 %v1514, %v1695
    %v1697 = vpop.f32.mrb[0].mxu0
    %v1698 = vadd.f32 %v1518, %v1697
    %v1699 = vpop.f32.mrb[0].mxu0
    %v1700 = vadd.f32 %v1514, %v1699
    %v1701 = vpop.f32.mrb[0].mxu0
    %v1702 = vadd.f32 %v1518, %v1701
    %1703 = vmatprep.mubr.bf16.mxu0 0
    %1704 = vmatmul.mubr.bf16.gmra.mrb[0].mxu0 %v1485
    %v1705 = vpop.f32.mrb[0].mxu0
    %v1706 = vadd.f32 %v1514, %v1705
    %v1707 = vpop.f32.mrb[0].mxu0
    %v1708 = vadd.f32 %v1518, %v1707
    %v1709 = vpop.f32.mrb[0].mxu0
    %v1710 = vadd.f32 %v1514, %v1709
    %v1711 = vpop.f32.mrb[0].mxu0
    %v1712 = vadd.f32 %v1518, %v1711
    %1713 = vmatprep.mubr.bf16.mxu0 0
    %1714 = vmatmul.mubr.bf16.gmra.mrb[0].mxu0 %v1486
    %v1715 = vpop.f32.mrb[0].mxu0
    %v1716 = vadd.f32 %v1514, %v1715
    %v1717 = vpop.f32.mrb[0].mxu0
    %v1718 = vadd.f32 %v1518, %v1717
    %v1719 = vpop.f32.mrb[0].mxu0
    %v1720 = vadd.f32 %v1514, %v1719
    %v1721 = vpop.f32.mrb[0].mxu0
    %v1722 = vadd.f32 %v1518, %v1721
    %1723 = vmatprep.mubr.bf16.mxu0 0
    %1724 = vmatmul.mubr.bf16.gmra.mrb[0].mxu0 %v1487
    %v1725 = vpop.f32.mrb[0].mxu0
    %v1726 = vadd.f32 %v1514, %v1725
    %v1727 = vpop.f32.mrb[0].mxu0
    %v1728 = vadd.f32 %v1518, %v1727
    %v1729 = vpop.f32.mrb[0].mxu0
    %v1730 = vadd.f32 %v1514, %v1729
    %v1731 = vpop.f32.mrb[0].mxu0
    %v1732 = vadd.f32 %v1518, %v1731
    %1733 = vmatprep.mubr.bf16.mxu0 0
    %1734 = vmatmul.mubr.bf16.gmra.mrb[0].mxu0 %v1488
    %v1735 = vpop.f32.mrb[0].mxu0
    %v1736 = vadd.f32 %v1514, %v1735
    %v1737 = vpop.f32.mrb[0].mxu0
    %v1738 = vadd.f32 %v1518, %v1737
    %v1739 = vpop.f32.mrb[0].mxu0
    %v1740 = vadd.f32 %v1514, %v1739
    %v1741 = vpop.f32.mrb[0].mxu0
    %v1742 = vadd.f32 %v1518, %v1741
    %1743 = vmatprep.mubr.bf16.mxu0 0
    %1744 = vmatmul.mubr.bf16.gmra.mrb[0].mxu0 %v1489
    %v1745 = vpop.f32.mrb[0].mxu0
    %v1746 = vadd.f32 %v1514, %v1745
    %v1747 = vpop.f32.mrb[0].mxu0
    %v1748 = vadd.f32 %v1518, %v1747
    %v1749 = vpop.f32.mrb[0].mxu0
    %v1750 = vadd.f32 %v1514, %v1749
    %v1751 = vpop.f32.mrb[0].mxu0
    %v1752 = vadd.f32 %v1518, %v1751
    %1753 = vmatprep.mubr.bf16.mxu0 0
    %1754 = vmatmul.mubr.bf16.gmra.mrb[0].mxu0 %v1490
    %v1755 = vpop.f32.mrb[0].mxu0
    %v1756 = vadd.f32 %v1514, %v1755
    %v1757 = vpop.f32.mrb[0].mxu0
    %v1758 = vadd.f32 %v1518, %v1757
    %v1759 = vpop.f32.mrb[0].mxu0
    %v1760 = vadd.f32 %v1514, %v1759
    %v1761 = vpop.f32.mrb[0].mxu0
    %v1762 = vadd.f32 %v1518, %v1761
    %1763 = vmatprep.mubr.bf16.mxu0 0
    %1764 = vmatmul.mubr.bf16.gmra.mrb[0].mxu0 %v1491
    %v1765 = vpop.f32.mrb[0].mxu0
    %v1766 = vadd.f32 %v1514, %v1765
    %v1767 = vpop.f32.mrb[0].mxu0
    %v1768 = vadd.f32 %v1518, %v1767
    %v1769 = vpop.f32.mrb[0].mxu0
    %v1770 = vadd.f32 %v1514, %v1769
    %v1771 = vpop.f32.mrb[0].mxu0
    %v1772 = vadd.f32 %v1518, %v1771
    %1773 = vmatprep.mubr.bf16.mxu0 0
    %1774 = vmatmul.mubr.bf16.gmra.mrb[0].mxu0 %v1492
    %v1775 = vpop.f32.mrb[0].mxu0
    %v1776 = vadd.f32 %v1514, %v1775
    %v1777 = vpop.f32.mrb[0].mxu0
    %v1778 = vadd.f32 %v1518, %v1777
    %v1779 = vpop.f32.mrb[0].mxu0
    %v1780 = vadd.f32 %v1514, %v1779
    %v1781 = vpop.f32.mrb[0].mxu0
    %v1782 = vadd.f32 %v1518, %v1781
    %1783 = vmatprep.mubr.bf16.mxu0 0
    %1784 = vmatmul.mubr.bf16.gmra.mrb[0].mxu0 %v1493
    %v1785 = vpop.f32.mrb[0].mxu0
    %v1786 = vadd.f32 %v1514, %v1785
    %v1787 = vpop.f32.mrb[0].mxu0
    %v1788 = vadd.f32 %v1518, %v1787
    %v1789 = vpop.f32.mrb[0].mxu0
    %v1790 = vadd.f32 %v1514, %v1789
    %v1791 = vpop.f32.mrb[0].mxu0
    %v1792 = vadd.f32 %v1518, %v1791
    %1793 = vdwg.mxu0
    %v1794 = vmax.f32 %v1636, 0.0
    %v1795 = vmax.f32 %v1638, 0.0
    %v1796 = vmax.f32 %v1640, 0.0
    %v1797 = vmax.f32 %v1642, 0.0
    %v1798 = vmax.f32 %v1646, 0.0
    %v1799 = vmax.f32 %v1648, 0.0
    %v1800 = vmax.f32 %v1650, 0.0
    %v1801 = vmax.f32 %v1652, 0.0
    %v1802 = vmax.f32 %v1656, 0.0
    %v1803 = vmax.f32 %v1658, 0.0
    %v1804 = vmax.f32 %v1660, 0.0
    %v1805 = vmax.f32 %v1662, 0.0
    %v1806 = vmax.f32 %v1666, 0.0
    %v1807 = vmax.f32 %v1668, 0.0
    %v1808 = vmax.f32 %v1670, 0.0
    %v1809 = vmax.f32 %v1672, 0.0
    %v1810 = vmax.f32 %v1676, 0.0
    %v1811 = vmax.f32 %v1678, 0.0
    %v1812 = vmax.f32 %v1680, 0.0
    %v1813 = vmax.f32 %v1682, 0.0
    %v1814 = vmax.f32 %v1686, 0.0
    %v1815 = vmax.f32 %v1688, 0.0
    %v1816 = vmax.f32 %v1690, 0.0
    %v1817 = vmax.f32 %v1692, 0.0
    %v1818 = vmax.f32 %v1696, 0.0
    %v1819 = vmax.f32 %v1698, 0.0
    %v1820 = vmax.f32 %v1700, 0.0
    %v1821 = vmax.f32 %v1702, 0.0
    %v1822 = vmax.f32 %v1706, 0.0
    %v1823 = vmax.f32 %v1708, 0.0
    %v1824 = vmax.f32 %v1710, 0.0
    %v1825 = vmax.f32 %v1712, 0.0
    %v1826 = vmax.f32 %v1716, 0.0
    %v1827 = vmax.f32 %v1718, 0.0
    %v1828 = vmax.f32 %v1720, 0.0
    %v1829 = vmax.f32 %v1722, 0.0
    %v1830 = vmax.f32 %v1726, 0.0
    %v1831 = vmax.f32 %v1728, 0.0
    %v1832 = vmax.f32 %v1730, 0.0
    %v1833 = vmax.f32 %v1732, 0.0
    %v1834 = vmax.f32 %v1736, 0.0
    %v1835 = vmax.f32 %v1738, 0.0
    %v1836 = vmax.f32 %v1740, 0.0
    %v1837 = vmax.f32 %v1742, 0.0
    %v1838 = vmax.f32 %v1746, 0.0
    %v1839 = vmax.f32 %v1748, 0.0
    %v1840 = vmax.f32 %v1750, 0.0
    %v1841 = vmax.f32 %v1752, 0.0
    %v1842 = vmax.f32 %v1756, 0.0
    %v1843 = vmax.f32 %v1758, 0.0
    %v1844 = vmax.f32 %v1760, 0.0
    %v1845 = vmax.f32 %v1762, 0.0
    %v1846 = vmax.f32 %v1766, 0.0
    %v1847 = vmax.f32 %v1768, 0.0
    %v1848 = vmax.f32 %v1770, 0.0
    %v1849 = vmax.f32 %v1772, 0.0
    %v1850 = vmax.f32 %v1776, 0.0
    %v1851 = vmax.f32 %v1778, 0.0
    %v1852 = vmax.f32 %v1780, 0.0
    %v1853 = vmax.f32 %v1782, 0.0
    %v1854 = vmax.f32 %v1786, 0.0
    %v1855 = vmax.f32 %v1788, 0.0
    %v1856 = vmax.f32 %v1790, 0.0
    %v1857 = vmax.f32 %v1792, 0.0
    %v1858 = vpack.c.bf16 %v1796, %v1794
    %v1859 = vpack.c.bf16 %v1797, %v1795
    %v1860 = vpack.c.bf16 %v1800, %v1798
    %v1861 = vpack.c.bf16 %v1801, %v1799
    %v1862 = vpack.c.bf16 %v1804, %v1802
    %v1863 = vpack.c.bf16 %v1805, %v1803
    %v1864 = vpack.c.bf16 %v1808, %v1806
    %v1865 = vpack.c.bf16 %v1809, %v1807
    %v1866 = vpack.c.bf16 %v1812, %v1810
    %v1867 = vpack.c.bf16 %v1813, %v1811
    %v1868 = vpack.c.bf16 %v1816, %v1814
    %v1869 = vpack.c.bf16 %v1817, %v1815
    %v1870 = vpack.c.bf16 %v1820, %v1818
    %v1871 = vpack.c.bf16 %v1821, %v1819
    %v1872 = vpack.c.bf16 %v1824, %v1822
    %v1873 = vpack.c.bf16 %v1825, %v1823
    %v1874 = vpack.c.bf16 %v1828, %v1826
    %v1875 = vpack.c.bf16 %v1829, %v1827
    %v1876 = vpack.c.bf16 %v1832, %v1830
    %v1877 = vpack.c.bf16 %v1833, %v1831
    %v1878 = vpack.c.bf16 %v1836, %v1834
    %v1879 = vpack.c.bf16 %v1837, %v1835
    %v1880 = vpack.c.bf16 %v1840, %v1838
    %v1881 = vpack.c.bf16 %v1841, %v1839
    %v1882 = vpack.c.bf16 %v1844, %v1842
    %v1883 = vpack.c.bf16 %v1845, %v1843
    %v1884 = vpack.c.bf16 %v1848, %v1846
    %v1885 = vpack.c.bf16 %v1849, %v1847
    %v1886 = vpack.c.bf16 %v1852, %v1850
    %v1887 = vpack.c.bf16 %v1853, %v1851
    %v1888 = vpack.c.bf16 %v1856, %v1854
    %v1889 = vpack.c.bf16 %v1857, %v1855
    %v1890 = vld [vmem:[#allocation13] sm:$0xf]
    %v1891 = vld [vmem:[#allocation13 + $0x4] sm:$0xf]
    %v1892 = vld [vmem:[#allocation13 + $0x8] sm:$0xf]
    %v1893 = vld [vmem:[#allocation13 + $0xc] sm:$0xf]
    %v1894 = vld [vmem:[#allocation13 + $0x10] sm:$0xf]
    %v1895 = vld [vmem:[#allocation13 + $0x14] sm:$0xf]
    %v1896 = vld [vmem:[#allocation13 + $0x18] sm:$0xf]
    %v1897 = vld [vmem:[#allocation13 + $0x1c] sm:$0xf]
    %v1898 = vld [vmem:[#allocation13 + $0x20] sm:$0xf]
    %v1899 = vld [vmem:[#allocation13 + $0x24] sm:$0xf]
    %v1900 = vld [vmem:[#allocation13 + $0x28] sm:$0xf]
    %v1901 = vld [vmem:[#allocation13 + $0x2c] sm:$0xf]
    %v1902 = vld [vmem:[#allocation13 + $0x30] sm:$0xf]
    %v1903 = vld [vmem:[#allocation13 + $0x34] sm:$0xf]
    %v1904 = vld [vmem:[#allocation13 + $0x38] sm:$0xf]
    %v1905 = vld [vmem:[#allocation13 + $0x3c] sm:$0xf]
    %v1906 = vld [vmem:[#allocation13 + $0x40] sm:$0xf]
    %v1907 = vld [vmem:[#allocation13 + $0x44] sm:$0xf]
    %v1908 = vld [vmem:[#allocation13 + $0x48] sm:$0xf]
    %v1909 = vld [vmem:[#allocation13 + $0x4c] sm:$0xf]
    %v1910 = vld [vmem:[#allocation13 + $0x50] sm:$0xf]
    %v1911 = vld [vmem:[#allocation13 + $0x54] sm:$0xf]
    %v1912 = vld [vmem:[#allocation13 + $0x58] sm:$0xf]
    %v1913 = vld [vmem:[#allocation13 + $0x5c] sm:$0xf]
    %v1914 = vld [vmem:[#allocation13 + $0x60] sm:$0xf]
    %v1915 = vld [vmem:[#allocation13 + $0x64] sm:$0xf]
    %v1916 = vld [vmem:[#allocation13 + $0x68] sm:$0xf]
    %v1917 = vld [vmem:[#allocation13 + $0x6c] sm:$0xf]
    %v1918 = vld [vmem:[#allocation13 + $0x70] sm:$0xf]
    %v1919 = vld [vmem:[#allocation13 + $0x74] sm:$0xf]
    %v1920 = vld [vmem:[#allocation13 + $0x78] sm:$0xf]
    %v1921 = vld [vmem:[#allocation13 + $0x7c] sm:$0xf]
    %v1923 = vlaneseq
    %v1924 = vshrl.u32 %v1923, 7
    %v1925 = vsub.s32 0, %v1924
    %v1926 = vrot.slane %v196, %v1925
    %v1960 = vunpack.c.l.b16 %v1890
    %v1961 = vunpack.c.l.b16 %v1891
    %v1962 = vunpack.c.l.b16 %v1892
    %v1963 = vunpack.c.l.b16 %v1893
    %v1964 = vunpack.c.l.b16 %v1894
    %v1965 = vunpack.c.l.b16 %v1895
    %v1966 = vunpack.c.l.b16 %v1896
    %v1967 = vunpack.c.l.b16 %v1897
    %v1968 = vunpack.c.l.b16 %v1898
    %v1969 = vunpack.c.l.b16 %v1899
    %v1970 = vunpack.c.l.b16 %v1900
    %v1971 = vunpack.c.l.b16 %v1901
    %v1972 = vunpack.c.l.b16 %v1902
    %v1973 = vunpack.c.l.b16 %v1903
    %v1974 = vunpack.c.l.b16 %v1904
    %v1975 = vunpack.c.l.b16 %v1905
    %v1976 = vunpack.c.l.b16 %v1906
    %v1977 = vunpack.c.l.b16 %v1907
    %v1978 = vunpack.c.l.b16 %v1908
    %v1979 = vunpack.c.l.b16 %v1909
    %v1980 = vunpack.c.l.b16 %v1910
    %v1981 = vunpack.c.l.b16 %v1911
    %v1982 = vunpack.c.l.b16 %v1912
    %v1983 = vunpack.c.l.b16 %v1913
    %v1984 = vunpack.c.l.b16 %v1914
    %v1985 = vunpack.c.l.b16 %v1915
    %v1986 = vunpack.c.l.b16 %v1916
    %v1987 = vunpack.c.l.b16 %v1917
    %v1988 = vunpack.c.l.b16 %v1918
    %v1989 = vunpack.c.l.b16 %v1919
    %v1990 = vunpack.c.l.b16 %v1920
    %v1991 = vunpack.c.l.b16 %v1921
    %v1992 = vpack.c.b16 %v1961, %v1960
    %v1993 = vpack.c.b16 %v1963, %v1962
    %v1994 = vpack.c.b16 %v1965, %v1964
    %v1995 = vpack.c.b16 %v1967, %v1966
    %v1996 = vpack.c.b16 %v1969, %v1968
    %v1997 = vpack.c.b16 %v1971, %v1970
    %v1998 = vpack.c.b16 %v1973, %v1972
    %v1999 = vpack.c.b16 %v1975, %v1974
    %v2000 = vpack.c.b16 %v1977, %v1976
    %v2001 = vpack.c.b16 %v1979, %v1978
    %v2002 = vpack.c.b16 %v1981, %v1980
    %v2003 = vpack.c.b16 %v1983, %v1982
    %v2004 = vpack.c.b16 %v1985, %v1984
    %v2005 = vpack.c.b16 %v1987, %v1986
    %v2006 = vpack.c.b16 %v1989, %v1988
    %v2007 = vpack.c.b16 %v1991, %v1990
    %2024 = vmatprep.subr.bf16.mxu0 0
    %2025 = vmatpush1.bf16.msra.mxu0 %v1992
    %2026 = vmatprep.subr.bf16.mxu0 0
    %2027 = vmatpush1.bf16.msra.mxu0 %v1993
    %2028 = vmatprep.subr.bf16.mxu0 0
    %2029 = vmatpush1.bf16.msra.mxu0 %v1994
    %2030 = vmatprep.subr.bf16.mxu0 0
    %2031 = vmatpush1.bf16.msra.mxu0 %v1995
    %2032 = vmatprep.subr.bf16.mxu0 0
    %2033 = vmatpush1.bf16.msra.mxu0 %v1996
    %2034 = vmatprep.subr.bf16.mxu0 0
    %2035 = vmatpush1.bf16.msra.mxu0 %v1997
    %2036 = vmatprep.subr.bf16.mxu0 0
    %2037 = vmatpush1.bf16.msra.mxu0 %v1998
    %2038 = vmatprep.subr.bf16.mxu0 0
    %2039 = vmatpush1.bf16.msra.mxu0 %v1999
    %2040 = vmatprep.subr.bf16.mxu0 0
    %2041 = vmatpush1.bf16.msra.mxu0 %v2000
    %2042 = vmatprep.subr.bf16.mxu0 0
    %2043 = vmatpush1.bf16.msra.mxu0 %v2001
    %2044 = vmatprep.subr.bf16.mxu0 0
    %2045 = vmatpush1.bf16.msra.mxu0 %v2002
    %2046 = vmatprep.subr.bf16.mxu0 0
    %2047 = vmatpush1.bf16.msra.mxu0 %v2003
    %2048 = vmatprep.subr.bf16.mxu0 0
    %2049 = vmatpush1.bf16.msra.mxu0 %v2004
    %2050 = vmatprep.subr.bf16.mxu0 0
    %2051 = vmatpush1.bf16.msra.mxu0 %v2005
    %2052 = vmatprep.subr.bf16.mxu0 0
    %2053 = vmatpush1.bf16.msra.mxu0 %v2006
    %2054 = vmatprep.subr.bf16.mxu0 0
    %2055 = vmatpush1.bf16.msra.mxu0 %v2007
    %2056 = vmatprep.mubr.bf16.mxu0 %v1859
    %2057 = vmatmul.mubr.bf16.gmra.mrb[0].mxu0 %v1858
    %v2058 = vpop.f32.mrb[0].mxu0
    %v2059 = vadd.f32 %v1926, %v2058
    %v2060 = vpop.f32.mrb[0].mxu0
    %v2061 = vpop.f32.mrb[0].mxu0
    %v2062 = vadd.f32 %v1926, %v2061
    %v2063 = vpop.f32.mrb[0].mxu0
    %2064 = vmatprep.mubr.bf16.mxu0 %v1861
    %2065 = vmatmul.mubr.bf16.gmra.mrb[0].mxu0 %v1860
    %v2066 = vpop.f32.mrb[0].mxu0
    %v2067 = vadd.f32 %v1926, %v2066
    %v2068 = vpop.f32.mrb[0].mxu0
    %v2069 = vpop.f32.mrb[0].mxu0
    %v2070 = vadd.f32 %v1926, %v2069
    %v2071 = vpop.f32.mrb[0].mxu0
    %2072 = vmatprep.mubr.bf16.mxu0 %v1863
    %2073 = vmatmul.mubr.bf16.gmra.mrb[0].mxu0 %v1862
    %v2074 = vpop.f32.mrb[0].mxu0
    %v2075 = vadd.f32 %v1926, %v2074
    %v2076 = vpop.f32.mrb[0].mxu0
    %v2077 = vpop.f32.mrb[0].mxu0
    %v2078 = vadd.f32 %v1926, %v2077
    %v2079 = vpop.f32.mrb[0].mxu0
    %2080 = vmatprep.mubr.bf16.mxu0 %v1865
    %2081 = vmatmul.mubr.bf16.gmra.mrb[0].mxu0 %v1864
    %v2082 = vpop.f32.mrb[0].mxu0
    %v2083 = vadd.f32 %v1926, %v2082
    %v2084 = vpop.f32.mrb[0].mxu0
    %v2085 = vpop.f32.mrb[0].mxu0
    %v2086 = vadd.f32 %v1926, %v2085
    %v2087 = vpop.f32.mrb[0].mxu0
    %2088 = vmatprep.mubr.bf16.mxu0 %v1867
    %2089 = vmatmul.mubr.bf16.gmra.mrb[0].mxu0 %v1866
    %v2090 = vpop.f32.mrb[0].mxu0
    %v2091 = vadd.f32 %v1926, %v2090
    %v2092 = vpop.f32.mrb[0].mxu0
    %v2093 = vpop.f32.mrb[0].mxu0
    %v2094 = vadd.f32 %v1926, %v2093
    %v2095 = vpop.f32.mrb[0].mxu0
    %2096 = vmatprep.mubr.bf16.mxu0 %v1869
    %2097 = vmatmul.mubr.bf16.gmra.mrb[0].mxu0 %v1868
    %v2098 = vpop.f32.mrb[0].mxu0
    %v2099 = vadd.f32 %v1926, %v2098
    %v2100 = vpop.f32.mrb[0].mxu0
    %v2101 = vpop.f32.mrb[0].mxu0
    %v2102 = vadd.f32 %v1926, %v2101
    %v2103 = vpop.f32.mrb[0].mxu0
    %2104 = vmatprep.mubr.bf16.mxu0 %v1871
    %2105 = vmatmul.mubr.bf16.gmra.mrb[0].mxu0 %v1870
    %v2106 = vpop.f32.mrb[0].mxu0
    %v2107 = vadd.f32 %v1926, %v2106
    %v2108 = vpop.f32.mrb[0].mxu0
    %v2109 = vpop.f32.mrb[0].mxu0
    %v2110 = vadd.f32 %v1926, %v2109
    %v2111 = vpop.f32.mrb[0].mxu0
    %2112 = vmatprep.mubr.bf16.mxu0 %v1873
    %2113 = vmatmul.mubr.bf16.gmra.mrb[0].mxu0 %v1872
    %v2114 = vpop.f32.mrb[0].mxu0
    %v2115 = vadd.f32 %v1926, %v2114
    %v2116 = vpop.f32.mrb[0].mxu0
    %v2117 = vpop.f32.mrb[0].mxu0
    %v2118 = vadd.f32 %v1926, %v2117
    %v2119 = vpop.f32.mrb[0].mxu0
    %2120 = vmatprep.mubr.bf16.mxu0 %v1875
    %2121 = vmatmul.mubr.bf16.gmra.mrb[0].mxu0 %v1874
    %v2122 = vpop.f32.mrb[0].mxu0
    %v2123 = vadd.f32 %v1926, %v2122
    %v2124 = vpop.f32.mrb[0].mxu0
    %v2125 = vpop.f32.mrb[0].mxu0
    %v2126 = vadd.f32 %v1926, %v2125
    %v2127 = vpop.f32.mrb[0].mxu0
    %2128 = vmatprep.mubr.bf16.mxu0 %v1877
    %2129 = vmatmul.mubr.bf16.gmra.mrb[0].mxu0 %v1876
    %v2130 = vpop.f32.mrb[0].mxu0
    %v2131 = vadd.f32 %v1926, %v2130
    %v2132 = vpop.f32.mrb[0].mxu0
    %v2133 = vpop.f32.mrb[0].mxu0
    %v2134 = vadd.f32 %v1926, %v2133
    %v2135 = vpop.f32.mrb[0].mxu0
    %2136 = vmatprep.mubr.bf16.mxu0 %v1879
    %2137 = vmatmul.mubr.bf16.gmra.mrb[0].mxu0 %v1878
    %v2138 = vpop.f32.mrb[0].mxu0
    %v2139 = vadd.f32 %v1926, %v2138
    %v2140 = vpop.f32.mrb[0].mxu0
    %v2141 = vpop.f32.mrb[0].mxu0
    %v2142 = vadd.f32 %v1926, %v2141
    %v2143 = vpop.f32.mrb[0].mxu0
    %2144 = vmatprep.mubr.bf16.mxu0 %v1881
    %2145 = vmatmul.mubr.bf16.gmra.mrb[0].mxu0 %v1880
    %v2146 = vpop.f32.mrb[0].mxu0
    %v2147 = vadd.f32 %v1926, %v2146
    %v2148 = vpop.f32.mrb[0].mxu0
    %v2149 = vpop.f32.mrb[0].mxu0
    %v2150 = vadd.f32 %v1926, %v2149
    %v2151 = vpop.f32.mrb[0].mxu0
    %2152 = vmatprep.mubr.bf16.mxu0 %v1883
    %2153 = vmatmul.mubr.bf16.gmra.mrb[0].mxu0 %v1882
    %v2154 = vpop.f32.mrb[0].mxu0
    %v2155 = vadd.f32 %v1926, %v2154
    %v2156 = vpop.f32.mrb[0].mxu0
    %v2157 = vpop.f32.mrb[0].mxu0
    %v2158 = vadd.f32 %v1926, %v2157
    %v2159 = vpop.f32.mrb[0].mxu0
    %2160 = vmatprep.mubr.bf16.mxu0 %v1885
    %2161 = vmatmul.mubr.bf16.gmra.mrb[0].mxu0 %v1884
    %v2162 = vpop.f32.mrb[0].mxu0
    %v2163 = vadd.f32 %v1926, %v2162
    %v2164 = vpop.f32.mrb[0].mxu0
    %v2165 = vpop.f32.mrb[0].mxu0
    %v2166 = vadd.f32 %v1926, %v2165
    %v2167 = vpop.f32.mrb[0].mxu0
    %2168 = vmatprep.mubr.bf16.mxu0 %v1887
    %2169 = vmatmul.mubr.bf16.gmra.mrb[0].mxu0 %v1886
    %v2170 = vpop.f32.mrb[0].mxu0
    %v2171 = vadd.f32 %v1926, %v2170
    %v2172 = vpop.f32.mrb[0].mxu0
    %v2173 = vpop.f32.mrb[0].mxu0
    %v2174 = vadd.f32 %v1926, %v2173
    %v2175 = vpop.f32.mrb[0].mxu0
    %2176 = vmatprep.mubr.bf16.mxu0 %v1889
    %2177 = vmatmul.mubr.bf16.gmra.mrb[0].mxu0 %v1888
    %v2178 = vpop.f32.mrb[0].mxu0
    %v2179 = vadd.f32 %v1926, %v2178
    %v2180 = vpop.f32.mrb[0].mxu0
    %v2181 = vpop.f32.mrb[0].mxu0
    %v2182 = vadd.f32 %v1926, %v2181
    %v2183 = vpop.f32.mrb[0].mxu0
    %2184 = vdwg.mxu0
    %2185 = vst [vmem:[#allocation14] sm:$0xff] %v2059
    %2186 = vst [vmem:[#allocation14 + $0x8] sm:$0xff] %v2062
    %2187 = vst [vmem:[#allocation14 + $0x10] sm:$0xff] %v2067
    %2188 = vst [vmem:[#allocation14 + $0x18] sm:$0xff] %v2070
    %2189 = vst [vmem:[#allocation14 + $0x20] sm:$0xff] %v2075
    %2190 = vst [vmem:[#allocation14 + $0x28] sm:$0xff] %v2078
    %2191 = vst [vmem:[#allocation14 + $0x30] sm:$0xff] %v2083
    %2192 = vst [vmem:[#allocation14 + $0x38] sm:$0xff] %v2086
    %2193 = vst [vmem:[#allocation14 + $0x40] sm:$0xff] %v2091
    %2194 = vst [vmem:[#allocation14 + $0x48] sm:$0xff] %v2094
    %2195 = vst [vmem:[#allocation14 + $0x50] sm:$0xff] %v2099
    %2196 = vst [vmem:[#allocation14 + $0x58] sm:$0xff] %v2102
    %2197 = vst [vmem:[#allocation14 + $0x60] sm:$0xff] %v2107
    %2198 = vst [vmem:[#allocation14 + $0x68] sm:$0xff] %v2110
    %2199 = vst [vmem:[#allocation14 + $0x70] sm:$0xff] %v2115
    %2200 = vst [vmem:[#allocation14 + $0x78] sm:$0xff] %v2118
    %2201 = vst [vmem:[#allocation14 + $0x80] sm:$0xff] %v2123
    %2202 = vst [vmem:[#allocation14 + $0x88] sm:$0xff] %v2126
    %2203 = vst [vmem:[#allocation14 + $0x90] sm:$0xff] %v2131
    %2204 = vst [vmem:[#allocation14 + $0x98] sm:$0xff] %v2134
    %2205 = vst [vmem:[#allocation14 + $0xa0] sm:$0xff] %v2139
    %2206 = vst [vmem:[#allocation14 + $0xa8] sm:$0xff] %v2142
    %2207 = vst [vmem:[#allocation14 + $0xb0] sm:$0xff] %v2147
    %2208 = vst [vmem:[#allocation14 + $0xb8] sm:$0xff] %v2150
    %2209 = vst [vmem:[#allocation14 + $0xc0] sm:$0xff] %v2155
    %2210 = vst [vmem:[#allocation14 + $0xc8] sm:$0xff] %v2158
    %2211 = vst [vmem:[#allocation14 + $0xd0] sm:$0xff] %v2163
    %2212 = vst [vmem:[#allocation14 + $0xd8] sm:$0xff] %v2166
    %2213 = vst [vmem:[#allocation14 + $0xe0] sm:$0xff] %v2171
    %2214 = vst [vmem:[#allocation14 + $0xe8] sm:$0xff] %v2174
    %2215 = vst [vmem:[#allocation14 + $0xf0] sm:$0xff] %v2179
    %2216 = vst [vmem:[#allocation14 + $0xf8] sm:$0xff] %v2182
    // Predicated region
    $region82: #{_lambda_.1} parent=1 // pred_check
      _
    $region83: #{_lambda_.1} parent=1 // pred_check_branch
      %2218 = sbr.rel (0) target = $region85
    $region84: #{_lambda_.1} parent=1 // pred_region
      _
    $region85: #{_lambda_.1} parent=1 // pred_fallthru
      _
    // Predicated region
    $region86: #{_lambda_.1} parent=1 // pred_check
      _
    $region87: #{_lambda_.1} parent=1 // pred_check_branch
      %2220 = sbr.rel (0) target = $region89
    $region88: #{_lambda_.1} parent=1 // pred_region
      %s2222 = ssub.s32 4096, 4096
      %2223 = vsyncadd [#allocation4], %s2222
      %s2224 = sshll.u32 [#allocation14], 4
      %s2225 = int_to_ptr.vmem [resolvable:$true] %s2224
      %2230 = dma.vmem_to_hbm [thread:$0]  %s2225, 4096, %s14, [#allocation4], 128, 128, 8
    $region89: #{_lambda_.1} parent=1 // pred_fallthru
      _
    // Predicated region
    $region90: #{_lambda_.1} parent=1 // pred_check
      _
    $region91: #{_lambda_.1} parent=1 // pred_check_branch
      %2232 = sbr.rel (0) target = $region93
    $region92: #{_lambda_.1} parent=1 // pred_region
      _
    $region93: #{_lambda_.1} parent=1 // pred_fallthru
      _
    // Predicated region
    $region94: #{_lambda_.1} parent=1 // pred_check
      _
    $region95: #{_lambda_.1} parent=1 // pred_check_branch
      %2234 = sbr.rel (0) target = $region97
    $region96: #{_lambda_.1} parent=1 // pred_region
      %2235 = dma.done [#allocation4], 4096
    $region97: #{_lambda_.1} parent=1 // pred_fallthru
      _
    %2236 = vsyncpa [#allocation3], 1
    %2237 = vsyncpa [#allocation6], 1
    %2238 = vsyncpa [#allocation9], 1
    %2239 = vsyncpa [#allocation12], 1
    %2240 = vsyncpa [#allocation4], 1

</llo_original>
